<compile_context>
chip_gen: v7x
topology: tpu7x:2x2x1
jax: 0.10.0
libtpu: 0.0.40
codegen_flags: <defaults>
</compile_context>

<pallas_src>
import jax
import jax.numpy as jnp
from jax.experimental import pallas as pl
from jax.experimental.pallas import tpu as pltpu

EPS = 1e-5


def _fused_head_kernel(x_ref, w1_ref, g1_ref, b1_ref, w2_ref, g2_ref, b2_ref, o_ref):
    """One hidden-feature tile: Linear1 + BN1 + ReLU, then accumulate the
    stage-2 partial product into the resident [B, OUT] output; BN2 is
    finalized in place on the last tile."""
    i = pl.program_id(0)

    @pl.when(i == 0)
    def _():
        o_ref[...] = jnp.zeros_like(o_ref)

    # ---- Stage 1: h = ReLU(BN1(x @ W1[:, tile])) for this hidden tile. ----
    # f32 operands cast to bf16 here (not in the wrapper) so HBM sees each
    # element exactly once; MXU accumulates in f32.
    h = jnp.dot(x_ref[...].astype(jnp.bfloat16),
                w1_ref[...].astype(jnp.bfloat16),
                preferred_element_type=jnp.float32)            # [B, th] f32

    # BatchNorm1d over the batch axis. Per-feature stats are independent, so
    # hidden-feature tiling needs no cross-tile reduction. Two-pass variance.
    inv_b = 1.0 / h.shape[0]
    mean1 = jnp.sum(h, axis=0, keepdims=True) * inv_b
    c1 = h - mean1
    var1 = jnp.sum(c1 * c1, axis=0, keepdims=True) * inv_b
    scale1 = g1_ref[...] * jax.lax.rsqrt(var1 + EPS)           # rsqrt -> EUP slot
    h = jnp.maximum(c1 * scale1 + b1_ref[...], 0.0)

    # ---- Stage 2 partial sum: o += h_tile @ W2[tile, :] (resident f32 acc). ----
    o_ref[...] += jnp.dot(h.astype(jnp.bfloat16),
                          w2_ref[...].astype(jnp.bfloat16),
                          preferred_element_type=jnp.float32)

    # ---- Finalize BN2 in place once every hidden tile has been accumulated. ----
    @pl.when(i == pl.num_programs(0) - 1)
    def _():
        z = o_ref[...]
        inv_b2 = 1.0 / z.shape[0]
        mean2 = jnp.sum(z, axis=0, keepdims=True) * inv_b2
        c2 = z - mean2
        var2 = jnp.sum(c2 * c2, axis=0, keepdims=True) * inv_b2
        scale2 = g2_ref[...] * jax.lax.rsqrt(var2 + EPS)
        o_ref[...] = c2 * scale2 + b2_ref[...]


def _pick_tile(dim, max_tile):
    """Largest divisor of `dim` <= max_tile, preferring multiples of 256
    (v6e/v7x MXU width), then 128. Raises rather than silently picking a
    tile that would blow the VMEM budget."""
    if dim <= max_tile:
        return dim
    for step in (256, 128):
        t = (max_tile // step) * step
        while t >= step:
            if dim % t == 0:
                return t
            t -= step
    raise ValueError(
        f"hidden dim {dim} has no 128-multiple tile <= {max_tile}; "
        "pad the hidden dimension or raise max_tile_h")


def _vmem_limit_bytes(B, IN, HID, OUT, th):
    f32, bf16 = 4, 2
    needed = (
        B * IN * f32            # resident x (single-buffered when Buffered(1) works)
        + B * IN * bf16         # in-kernel bf16 copy of x
        + 2 * IN * th * f32     # W1 tile (double-buffered)
        + 2 * th * OUT * f32    # W2 tile (double-buffered)
        + 2 * B * OUT * f32     # resident f32 output accumulator (+ writeback)
        + 2 * B * th * f32      # h tile and elementwise temporaries
        + 4 * 2 * th * f32      # gamma1/beta1 tiles (double-buffered)
        + 2 * 2 * OUT * f32     # gamma2/beta2
    )
    try:
        cap = int(pltpu.get_tpu_info().vmem_capacity_bytes) - (8 << 20)
    except Exception:
        cap = 56 << 20          # safe below v7x's 64 MiB physical VMEM
    return int(max(min(needed + (8 << 20), cap), 16 << 20))


def projection_head(x, w1, g1, b1, w2, g2, b2, *, max_tile_h=512):
    """Fused nonlinear SimCLR projection head: BN2(ReLU(BN1(x @ W1)) @ W2).

    x : [B, in] f32        w1: [in, hid] f32 (pre-transposed vs torch Linear)
    g1, b1: [hid] f32      w2: [hid, out] f32       g2, b2: [out] f32
    returns [B, out] float32.
    """
    B, IN = x.shape
    HID = w1.shape[1]
    OUT = w2.shape[1]
    th = _pick_tile(HID, max_tile_h)
    n_tiles = HID // th

    x = jnp.asarray(x, jnp.float32)
    w1 = jnp.asarray(w1, jnp.float32)
    w2 = jnp.asarray(w2, jnp.float32)
    g1r = jnp.asarray(g1, jnp.float32).reshape(1, HID)
    b1r = jnp.asarray(b1, jnp.float32).reshape(1, HID)
    g2r = jnp.asarray(g2, jnp.float32).reshape(1, OUT)
    b2r = jnp.asarray(b2, jnp.float32).reshape(1, OUT)

    vmem_limit = _vmem_limit_bytes(B, IN, HID, OUT, th)
    flops = 2 * B * IN * HID + 2 * B * HID * OUT + 12 * B * (HID + OUT)
    bytes_accessed = (B * IN + IN * HID + HID * OUT + 2 * HID + 2 * OUT + B * OUT) * 4

    def build(single_buffer_x):
        # x's block index is constant across the grid; single-buffering it
        # halves its VMEM residency (key for v7x's 64 MiB VMEM).
        x_kwargs = {"pipeline_mode": pl.Buffered(1)} if single_buffer_x else {}
        return pl.pallas_call(
            _fused_head_kernel,
            out_shape=jax.ShapeDtypeStruct((B, OUT), jnp.float32),
            grid_spec=pltpu.PrefetchScalarGridSpec(
                num_scalar_prefetch=0,
                grid=(n_tiles,),                                     # hidden-tile reduction
                in_specs=[
                    pl.BlockSpec((B, IN), lambda i: (0, 0), **x_kwargs),  # x, resident
                    pl.BlockSpec((IN, th), lambda i: (0, i)),        # W1 hidden tile
                    pl.BlockSpec((1, th), lambda i: (0, i)),         # gamma1 tile
                    pl.BlockSpec((1, th), lambda i: (0, i)),         # beta1 tile
                    pl.BlockSpec((th, OUT), lambda i: (i, 0)),       # W2 hidden tile
                    pl.BlockSpec((1, OUT), lambda i: (0, 0)),        # gamma2
                    pl.BlockSpec((1, OUT), lambda i: (0, 0)),        # beta2
                ],
                out_specs=pl.BlockSpec((B, OUT), lambda i: (0, 0)),  # resident accumulator
            ),
            compiler_params=pltpu.CompilerParams(
                dimension_semantics=("arbitrary",),                  # reduction axis
                vmem_limit_bytes=vmem_limit,
            ),
            cost_estimate=pl.CostEstimate(
                flops=flops, transcendentals=HID + OUT, bytes_accessed=bytes_accessed),
        )

    def run(single_buffer_x):
        out = build(single_buffer_x)(x, w1, g1r, b1r, w2, g2r, b2r)
        return jax.block_until_ready(out)

    try:
        return run(True)
    except Exception:
        # pipeline_mode=pl.Buffered(1) not supported by this jax build; fall
        # back to the default double-buffered resident block (correctness and
        # everything else identical).
        return run(False)


def _reference(x, w1, g1, b1, w2, g2, b2):
    """Pure-JAX reference with the same numerics (bf16 MXU operands, f32 accum)."""
    f32 = jnp.float32
    xb = x.astype(jnp.bfloat16).astype(f32)
    w1b = w1.astype(jnp.bfloat16).astype(f32)
    h = xb @ w1b
    m = h.mean(0, keepdims=True)
    v = ((h - m) ** 2).mean(0, keepdims=True)
    h = (h - m) / jnp.sqrt(v + EPS) * g1 + b1
    h = jnp.maximum(h, 0.0).astype(jnp.bfloat16).astype(f32)
    w2b = w2.astype(jnp.bfloat16).astype(f32)
    z = h @ w2b
    m2 = z.mean(0, keepdims=True)
    v2 = ((z - m2) ** 2).mean(0, keepdims=True)
    return (z - m2) / jnp.sqrt(v2 + EPS) * g2 + b2


if __name__ == "__main__":
    # Small but lane-dense shapes: HID=1024 with the default max_tile_h=512
    # gives 2 hidden tiles, exercising the fused accumulate + BN2 finalize.
    B, IN, HID, OUT = 32, 128, 1024, 128

    key = jax.random.PRNGKey(0)
    kx, kw1, kw2 = jax.random.split(key, 3)

    x = jax.random.normal(kx, (B, IN), dtype=jnp.float32)

    # nn.Linear-style uniform init; W stored pre-transposed as [in, out].
    bound1 = 1.0 / jnp.sqrt(IN)
    bound2 = 1.0 / jnp.sqrt(HID)
    w1 = jax.random.uniform(kw1, (IN, HID), jnp.float32, -bound1, bound1)
    w2 = jax.random.uniform(kw2, (HID, OUT), jnp.float32, -bound2, bound2)

    # BatchNorm1d params as PyTorch initializes them: gamma=1, beta=0.
    g1 = jnp.ones((HID,), jnp.float32)
    b1 = jnp.zeros((HID,), jnp.float32)
    g2 = jnp.ones((OUT,), jnp.float32)
    b2 = jnp.zeros((OUT,), jnp.float32)

    out = projection_head(x, w1, g1, b1, w2, g2, b2)
    out = jax.block_until_ready(out)

    ref = _reference(x, w1, g1, b1, w2, g2, b2)
    assert out.shape == (B, OUT)
    assert bool(jnp.all(jnp.isfinite(out)))
    assert jnp.allclose(out, ref, atol=3e-2, rtol=3e-2), "mismatch vs reference"

    print("KERNEL_OK")
</pallas_src>

<mosaic_0001>
module attributes {stable_mosaic.version = 11 : i64} {
  func.func @_fused_head_kernel(%arg0: i32, %arg1: memref<32x128xf32, #tpu.memory_space<vmem>>, %arg2: memref<128x512xf32, #tpu.memory_space<vmem>>, %arg3: memref<1x512xf32, #tpu.memory_space<vmem>>, %arg4: memref<1x512xf32, #tpu.memory_space<vmem>>, %arg5: memref<512x128xf32, #tpu.memory_space<vmem>>, %arg6: memref<1x128xf32, #tpu.memory_space<vmem>>, %arg7: memref<1x128xf32, #tpu.memory_space<vmem>>, %arg8: memref<32x128xf32, #tpu.memory_space<vmem>>) attributes {dimension_semantics = [#tpu.dimension_semantics<arbitrary>], iteration_bounds = array<i64: 2>, scalar_prefetch = 0 : i64, scratch_operands = 0 : i64, tpu.core_type = #tpu.core_type<tc>, window_params = [{pipeline_mode = #tpu.pipeline_mode<synchronous>, transform_indices = @transform_0, window_bounds = array<i64: 32, 128>}, {transform_indices = @transform_1, window_bounds = array<i64: 128, 512>}, {transform_indices = @transform_2, window_bounds = array<i64: 1, 512>}, {transform_indices = @transform_3, window_bounds = array<i64: 1, 512>}, {transform_indices = @transform_4, window_bounds = array<i64: 512, 128>}, {pipeline_mode = #tpu.pipeline_mode<synchronous>, transform_indices = @transform_5, window_bounds = array<i64: 1, 128>}, {pipeline_mode = #tpu.pipeline_mode<synchronous>, transform_indices = @transform_6, window_bounds = array<i64: 1, 128>}, {pipeline_mode = #tpu.pipeline_mode<synchronous>, transform_indices = @transform_7, window_bounds = array<i64: 32, 128>}]} {
    %c0_i32 = arith.constant 0 : i32
    %0 = arith.cmpi eq, %arg0, %c0_i32 : i32
    %1 = arith.extui %0 : i1 to i32
    %c0_i32_0 = arith.constant 0 : i32
    %2 = arith.cmpi ne, %1, %c0_i32_0 : i32
    scf.if %2 {
      %cst_22 = arith.constant 0.000000e+00 : f32
      %41 = vector.broadcast %cst_22 : f32 to vector<32x128xf32>
      %c0_23 = arith.constant 0 : index
      %c0_24 = arith.constant 0 : index
      %42 = vector.load %arg8[%c0_23, %c0_24] : memref<32x128xf32, #tpu.memory_space<vmem>>, vector<32x128xf32>
      tpu.vector_store %arg8[%c0_23, %c0_24], %41 {strides = array<i32>} : memref<32x128xf32, #tpu.memory_space<vmem>>, vector<32x128xf32>,
    } else {
    }
    %c0 = arith.constant 0 : index
    %c0_1 = arith.constant 0 : index
    %3 = vector.load %arg1[%c0, %c0_1] : memref<32x128xf32, #tpu.memory_space<vmem>>, vector<32x128xf32>
    %4 = arith.truncf %3 : vector<32x128xf32> to vector<32x128xbf16>
    %c0_2 = arith.constant 0 : index
    %c0_3 = arith.constant 0 : index
    %5 = vector.load %arg2[%c0_2, %c0_3] : memref<128x512xf32, #tpu.memory_space<vmem>>, vector<128x512xf32>
    %6 = arith.truncf %5 : vector<128x512xf32> to vector<128x512xbf16>
    %cst = arith.constant dense<0.000000e+00> : vector<32x512xf32>
    %7 = tpu.matmul %4, %6, %cst {dimension_numbers = #tpu.dot_dimension_numbers<[1], [0], [0], [1], [0, 0, 1, 1], [], []>} : vector<32x128xbf16>, vector<128x512xbf16>, vector<32x512xf32> -> vector<32x512xf32>
    %cst_4 = arith.constant dense<0.000000e+00> : vector<512xf32>
    %8 = vector.multi_reduction <add>, %7, %cst_4 [0] : vector<32x512xf32> to vector<512xf32>
    %9 = vector.shape_cast %8 : vector<512xf32> to vector<1x512xf32>
    %cst_5 = arith.constant 3.125000e-02 : f32
    %10 = vector.broadcast %cst_5 : f32 to vector<1x512xf32>
    %11 = arith.mulf %9, %10 : vector<1x512xf32>
    %12 = vector.broadcast %11 : vector<1x512xf32> to vector<32x512xf32>
    %13 = arith.subf %7, %12 : vector<32x512xf32>
    %14 = arith.mulf %13, %13 : vector<32x512xf32>
    %cst_6 = arith.constant dense<0.000000e+00> : vector<512xf32>
    %15 = vector.multi_reduction <add>, %14, %cst_6 [0] : vector<32x512xf32> to vector<512xf32>
    %16 = vector.shape_cast %15 : vector<512xf32> to vector<1x512xf32>
    %cst_7 = arith.constant 3.125000e-02 : f32
    %17 = vector.broadcast %cst_7 : f32 to vector<1x512xf32>
    %18 = arith.mulf %16, %17 : vector<1x512xf32>
    %c0_8 = arith.constant 0 : index
    %c0_9 = arith.constant 0 : index
    %19 = vector.load %arg3[%c0_8, %c0_9] : memref<1x512xf32, #tpu.memory_space<vmem>>, vector<1x512xf32>
    %cst_10 = arith.constant 9.99999974E-6 : f32
    %20 = vector.broadcast %cst_10 : f32 to vector<1x512xf32>
    %21 = arith.addf %18, %20 : vector<1x512xf32>
    %22 = math.rsqrt %21 : vector<1x512xf32>
    %23 = arith.mulf %19, %22 : vector<1x512xf32>
    %24 = vector.broadcast %23 : vector<1x512xf32> to vector<32x512xf32>
    %25 = arith.mulf %13, %24 : vector<32x512xf32>
    %c0_11 = arith.constant 0 : index
    %c0_12 = arith.constant 0 : index
    %26 = vector.load %arg4[%c0_11, %c0_12] : memref<1x512xf32, #tpu.memory_space<vmem>>, vector<1x512xf32>
    %27 = vector.broadcast %26 : vector<1x512xf32> to vector<32x512xf32>
    %28 = arith.addf %25, %27 : vector<32x512xf32>
    %cst_13 = arith.constant 0.000000e+00 : f32
    %29 = vector.broadcast %cst_13 : f32 to vector<32x512xf32>
    %30 = arith.maximumf %28, %29 : vector<32x512xf32>
    %c0_14 = arith.constant 0 : index
    %c0_15 = arith.constant 0 : index
    %31 = vector.load %arg8[%c0_14, %c0_15] : memref<32x128xf32, #tpu.memory_space<vmem>>, vector<32x128xf32>
    %32 = arith.truncf %30 : vector<32x512xf32> to vector<32x512xbf16>
    %c0_16 = arith.constant 0 : index
    %c0_17 = arith.constant 0 : index
    %33 = vector.load %arg5[%c0_16, %c0_17] : memref<512x128xf32, #tpu.memory_space<vmem>>, vector<512x128xf32>
    %34 = arith.truncf %33 : vector<512x128xf32> to vector<512x128xbf16>
    %cst_18 = arith.constant dense<0.000000e+00> : vector<32x128xf32>
    %35 = tpu.matmul %32, %34, %cst_18 {dimension_numbers = #tpu.dot_dimension_numbers<[1], [0], [0], [1], [0, 0, 1, 1], [], []>} : vector<32x512xbf16>, vector<512x128xbf16>, vector<32x128xf32> -> vector<32x128xf32>
    %36 = arith.addf %31, %35 : vector<32x128xf32>
    %c0_19 = arith.constant 0 : index
    %c0_20 = arith.constant 0 : index
    %37 = vector.load %arg8[%c0_19, %c0_20] : memref<32x128xf32, #tpu.memory_space<vmem>>, vector<32x128xf32>
    tpu.vector_store %arg8[%c0_19, %c0_20], %36 {strides = array<i32>} : memref<32x128xf32, #tpu.memory_space<vmem>>, vector<32x128xf32>,
    %c1_i32 = arith.constant 1 : i32
    %38 = arith.cmpi eq, %arg0, %c1_i32 : i32
    %39 = arith.extui %38 : i1 to i32
    %c0_i32_21 = arith.constant 0 : i32
    %40 = arith.cmpi ne, %39, %c0_i32_21 : i32
    scf.if %40 {
      %c0_22 = arith.constant 0 : index
      %c0_23 = arith.constant 0 : index
      %41 = vector.load %arg8[%c0_22, %c0_23] : memref<32x128xf32, #tpu.memory_space<vmem>>, vector<32x128xf32>
      %cst_24 = arith.constant dense<0.000000e+00> : vector<128xf32>
      %42 = vector.multi_reduction <add>, %41, %cst_24 [0] : vector<32x128xf32> to vector<128xf32>
      %43 = vector.shape_cast %42 : vector<128xf32> to vector<1x128xf32>
      %cst_25 = arith.constant 3.125000e-02 : f32
      %44 = vector.broadcast %cst_25 : f32 to vector<1x128xf32>
      %45 = arith.mulf %43, %44 : vector<1x128xf32>
      %46 = vector.broadcast %45 : vector<1x128xf32> to vector<32x128xf32>
      %47 = arith.subf %41, %46 : vector<32x128xf32>
      %48 = arith.mulf %47, %47 : vector<32x128xf32>
      %cst_26 = arith.constant dense<0.000000e+00> : vector<128xf32>
      %49 = vector.multi_reduction <add>, %48, %cst_26 [0] : vector<32x128xf32> to vector<128xf32>
      %50 = vector.shape_cast %49 : vector<128xf32> to vector<1x128xf32>
      %cst_27 = arith.constant 3.125000e-02 : f32
      %51 = vector.broadcast %cst_27 : f32 to vector<1x128xf32>
      %52 = arith.mulf %50, %51 : vector<1x128xf32>
      %c0_28 = arith.constant 0 : index
      %c0_29 = arith.constant 0 : index
      %53 = vector.load %arg6[%c0_28, %c0_29] : memref<1x128xf32, #tpu.memory_space<vmem>>, vector<1x128xf32>
      %cst_30 = arith.constant 9.99999974E-6 : f32
      %54 = vector.broadcast %cst_30 : f32 to vector<1x128xf32>
      %55 = arith.addf %52, %54 : vector<1x128xf32>
      %56 = math.rsqrt %55 : vector<1x128xf32>
      %57 = arith.mulf %53, %56 : vector<1x128xf32>
      %58 = vector.broadcast %57 : vector<1x128xf32> to vector<32x128xf32>
      %59 = arith.mulf %47, %58 : vector<32x128xf32>
      %c0_31 = arith.constant 0 : index
      %c0_32 = arith.constant 0 : index
      %60 = vector.load %arg7[%c0_31, %c0_32] : memref<1x128xf32, #tpu.memory_space<vmem>>, vector<1x128xf32>
      %61 = vector.broadcast %60 : vector<1x128xf32> to vector<32x128xf32>
      %62 = arith.addf %59, %61 : vector<32x128xf32>
      %c0_33 = arith.constant 0 : index
      %c0_34 = arith.constant 0 : index
      %63 = vector.load %arg8[%c0_33, %c0_34] : memref<32x128xf32, #tpu.memory_space<vmem>>, vector<32x128xf32>
      tpu.vector_store %arg8[%c0_33, %c0_34], %62 {strides = array<i32>} : memref<32x128xf32, #tpu.memory_space<vmem>>, vector<32x128xf32>,
    } else {
    }
    return
  }
  func.func @transform_0(%arg0: i32) -> (i32, i32) {
    %c0_i32 = arith.constant 0 : i32
    %c0_i32_0 = arith.constant 0 : i32
    %c0_i32_1 = arith.constant 0 : i32
    return %c0_i32, %c0_i32_0 : i32, i32
  }
  func.func @transform_1(%arg0: i32) -> (i32, i32) {
    %c0_i32 = arith.constant 0 : i32
    %c0_i32_0 = arith.constant 0 : i32
    return %c0_i32, %arg0 : i32, i32
  }
  func.func @transform_2(%arg0: i32) -> (i32, i32) {
    %c0_i32 = arith.constant 0 : i32
    %c0_i32_0 = arith.constant 0 : i32
    return %c0_i32, %arg0 : i32, i32
  }
  func.func @transform_3(%arg0: i32) -> (i32, i32) {
    %c0_i32 = arith.constant 0 : i32
    %c0_i32_0 = arith.constant 0 : i32
    return %c0_i32, %arg0 : i32, i32
  }
  func.func @transform_4(%arg0: i32) -> (i32, i32) {
    %c0_i32 = arith.constant 0 : i32
    %c0_i32_0 = arith.constant 0 : i32
    return %arg0, %c0_i32 : i32, i32
  }
  func.func @transform_5(%arg0: i32) -> (i32, i32) {
    %c0_i32 = arith.constant 0 : i32
    %c0_i32_0 = arith.constant 0 : i32
    %c0_i32_1 = arith.constant 0 : i32
    return %c0_i32, %c0_i32_0 : i32, i32
  }
  func.func @transform_6(%arg0: i32) -> (i32, i32) {
    %c0_i32 = arith.constant 0 : i32
    %c0_i32_0 = arith.constant 0 : i32
    %c0_i32_1 = arith.constant 0 : i32
    return %c0_i32, %c0_i32_0 : i32, i32
  }
  func.func @transform_7(%arg0: i32) -> (i32, i32) {
    %c0_i32 = arith.constant 0 : i32
    %c0_i32_0 = arith.constant 0 : i32
    %c0_i32_1 = arith.constant 0 : i32
    return %c0_i32, %c0_i32_0 : i32, i32
  }
}

module attributes {stable_mosaic.version = 11 : i64} {
  func.func @_fused_head_kernel(%arg0: i32, %arg1: memref<32x128xf32, #tpu.memory_space<vmem>>, %arg2: memref<128x512xf32, #tpu.memory_space<vmem>>, %arg3: memref<1x512xf32, #tpu.memory_space<vmem>>, %arg4: memref<1x512xf32, #tpu.memory_space<vmem>>, %arg5: memref<512x128xf32, #tpu.memory_space<vmem>>, %arg6: memref<1x128xf32, #tpu.memory_space<vmem>>, %arg7: memref<1x128xf32, #tpu.memory_space<vmem>>, %arg8: memref<32x128xf32, #tpu.memory_space<vmem>>) attributes {dimension_semantics = [#tpu.dimension_semantics<arbitrary>], iteration_bounds = array<i64: 2>, scalar_prefetch = 0 : i64, scratch_operands = 0 : i64, tpu.core_type = #tpu.core_type<tc>, window_params = [{pipeline_mode = #tpu.pipeline_mode<synchronous>, transform_indices = @transform_0, window_bounds = array<i64: 32, 128>}, {transform_indices = @transform_1, window_bounds = array<i64: 128, 512>}, {transform_indices = @transform_2, window_bounds = array<i64: 1, 512>}, {transform_indices = @transform_3, window_bounds = array<i64: 1, 512>}, {transform_indices = @transform_4, window_bounds = array<i64: 512, 128>}, {pipeline_mode = #tpu.pipeline_mode<synchronous>, transform_indices = @transform_5, window_bounds = array<i64: 1, 128>}, {pipeline_mode = #tpu.pipeline_mode<synchronous>, transform_indices = @transform_6, window_bounds = array<i64: 1, 128>}, {pipeline_mode = #tpu.pipeline_mode<synchronous>, transform_indices = @transform_7, window_bounds = array<i64: 32, 128>}]} {
    %c0_i32 = arith.constant 0 : i32
    %0 = arith.cmpi eq, %arg0, %c0_i32 : i32
    %1 = arith.extui %0 : i1 to i32
    %c0_i32_0 = arith.constant 0 : i32
    %2 = arith.cmpi ne, %1, %c0_i32_0 : i32
    scf.if %2 {
      %cst_22 = arith.constant 0.000000e+00 : f32
      %41 = vector.broadcast %cst_22 : f32 to vector<32x128xf32>
      %c0_23 = arith.constant 0 : index
      %c0_24 = arith.constant 0 : index
      %42 = vector.load %arg8[%c0_23, %c0_24] : memref<32x128xf32, #tpu.memory_space<vmem>>, vector<32x128xf32>
      tpu.vector_store %arg8[%c0_23, %c0_24], %41 {strides = array<i32>} : memref<32x128xf32, #tpu.memory_space<vmem>>, vector<32x128xf32>,
    } else {
    }
    %c0 = arith.constant 0 : index
    %c0_1 = arith.constant 0 : index
    %3 = vector.load %arg1[%c0, %c0_1] : memref<32x128xf32, #tpu.memory_space<vmem>>, vector<32x128xf32>
    %4 = arith.truncf %3 : vector<32x128xf32> to vector<32x128xbf16>
    %c0_2 = arith.constant 0 : index
    %c0_3 = arith.constant 0 : index
    %5 = vector.load %arg2[%c0_2, %c0_3] : memref<128x512xf32, #tpu.memory_space<vmem>>, vector<128x512xf32>
    %6 = arith.truncf %5 : vector<128x512xf32> to vector<128x512xbf16>
    %cst = arith.constant dense<0.000000e+00> : vector<32x512xf32>
    %7 = tpu.matmul %4, %6, %cst {dimension_numbers = #tpu.dot_dimension_numbers<[1], [0], [0], [1], [0, 0, 1, 1], [], []>} : vector<32x128xbf16>, vector<128x512xbf16>, vector<32x512xf32> -> vector<32x512xf32>
    %cst_4 = arith.constant dense<0.000000e+00> : vector<512xf32>
    %8 = vector.multi_reduction <add>, %7, %cst_4 [0] : vector<32x512xf32> to vector<512xf32>
    %9 = vector.shape_cast %8 : vector<512xf32> to vector<1x512xf32>
    %cst_5 = arith.constant 3.125000e-02 : f32
    %10 = vector.broadcast %cst_5 : f32 to vector<1x512xf32>
    %11 = arith.mulf %9, %10 : vector<1x512xf32>
    %12 = vector.broadcast %11 : vector<1x512xf32> to vector<32x512xf32>
    %13 = arith.subf %7, %12 : vector<32x512xf32>
    %14 = arith.mulf %13, %13 : vector<32x512xf32>
    %cst_6 = arith.constant dense<0.000000e+00> : vector<512xf32>
    %15 = vector.multi_reduction <add>, %14, %cst_6 [0] : vector<32x512xf32> to vector<512xf32>
    %16 = vector.shape_cast %15 : vector<512xf32> to vector<1x512xf32>
    %cst_7 = arith.constant 3.125000e-02 : f32
    %17 = vector.broadcast %cst_7 : f32 to vector<1x512xf32>
    %18 = arith.mulf %16, %17 : vector<1x512xf32>
    %c0_8 = arith.constant 0 : index
    %c0_9 = arith.constant 0 : index
    %19 = vector.load %arg3[%c0_8, %c0_9] : memref<1x512xf32, #tpu.memory_space<vmem>>, vector<1x512xf32>
    %cst_10 = arith.constant 9.99999974E-6 : f32
    %20 = vector.broadcast %cst_10 : f32 to vector<1x512xf32>
    %21 = arith.addf %18, %20 : vector<1x512xf32>
    %22 = math.rsqrt %21 : vector<1x512xf32>
    %23 = arith.mulf %19, %22 : vector<1x512xf32>
    %24 = vector.broadcast %23 : vector<1x512xf32> to vector<32x512xf32>
    %25 = arith.mulf %13, %24 : vector<32x512xf32>
    %c0_11 = arith.constant 0 : index
    %c0_12 = arith.constant 0 : index
    %26 = vector.load %arg4[%c0_11, %c0_12] : memref<1x512xf32, #tpu.memory_space<vmem>>, vector<1x512xf32>
    %27 = vector.broadcast %26 : vector<1x512xf32> to vector<32x512xf32>
    %28 = arith.addf %25, %27 : vector<32x512xf32>
    %cst_13 = arith.constant 0.000000e+00 : f32
    %29 = vector.broadcast %cst_13 : f32 to vector<32x512xf32>
    %30 = arith.maximumf %28, %29 : vector<32x512xf32>
    %c0_14 = arith.constant 0 : index
    %c0_15 = arith.constant 0 : index
    %31 = vector.load %arg8[%c0_14, %c0_15] : memref<32x128xf32, #tpu.memory_space<vmem>>, vector<32x128xf32>
    %32 = arith.truncf %30 : vector<32x512xf32> to vector<32x512xbf16>
    %c0_16 = arith.constant 0 : index
    %c0_17 = arith.constant 0 : index
    %33 = vector.load %arg5[%c0_16, %c0_17] : memref<512x128xf32, #tpu.memory_space<vmem>>, vector<512x128xf32>
    %34 = arith.truncf %33 : vector<512x128xf32> to vector<512x128xbf16>
    %cst_18 = arith.constant dense<0.000000e+00> : vector<32x128xf32>
    %35 = tpu.matmul %32, %34, %cst_18 {dimension_numbers = #tpu.dot_dimension_numbers<[1], [0], [0], [1], [0, 0, 1, 1], [], []>} : vector<32x512xbf16>, vector<512x128xbf16>, vector<32x128xf32> -> vector<32x128xf32>
    %36 = arith.addf %31, %35 : vector<32x128xf32>
    %c0_19 = arith.constant 0 : index
    %c0_20 = arith.constant 0 : index
    %37 = vector.load %arg8[%c0_19, %c0_20] : memref<32x128xf32, #tpu.memory_space<vmem>>, vector<32x128xf32>
    tpu.vector_store %arg8[%c0_19, %c0_20], %36 {strides = array<i32>} : memref<32x128xf32, #tpu.memory_space<vmem>>, vector<32x128xf32>,
    %c1_i32 = arith.constant 1 : i32
    %38 = arith.cmpi eq, %arg0, %c1_i32 : i32
    %39 = arith.extui %38 : i1 to i32
    %c0_i32_21 = arith.constant 0 : i32
    %40 = arith.cmpi ne, %39, %c0_i32_21 : i32
    scf.if %40 {
      %c0_22 = arith.constant 0 : index
      %c0_23 = arith.constant 0 : index
      %41 = vector.load %arg8[%c0_22, %c0_23] : memref<32x128xf32, #tpu.memory_space<vmem>>, vector<32x128xf32>
      %cst_24 = arith.constant dense<0.000000e+00> : vector<128xf32>
      %42 = vector.multi_reduction <add>, %41, %cst_24 [0] : vector<32x128xf32> to vector<128xf32>
      %43 = vector.shape_cast %42 : vector<128xf32> to vector<1x128xf32>
      %cst_25 = arith.constant 3.125000e-02 : f32
      %44 = vector.broadcast %cst_25 : f32 to vector<1x128xf32>
      %45 = arith.mulf %43, %44 : vector<1x128xf32>
      %46 = vector.broadcast %45 : vector<1x128xf32> to vector<32x128xf32>
      %47 = arith.subf %41, %46 : vector<32x128xf32>
      %48 = arith.mulf %47, %47 : vector<32x128xf32>
      %cst_26 = arith.constant dense<0.000000e+00> : vector<128xf32>
      %49 = vector.multi_reduction <add>, %48, %cst_26 [0] : vector<32x128xf32> to vector<128xf32>
      %50 = vector.shape_cast %49 : vector<128xf32> to vector<1x128xf32>
      %cst_27 = arith.constant 3.125000e-02 : f32
      %51 = vector.broadcast %cst_27 : f32 to vector<1x128xf32>
      %52 = arith.mulf %50, %51 : vector<1x128xf32>
      %c0_28 = arith.constant 0 : index
      %c0_29 = arith.constant 0 : index
      %53 = vector.load %arg6[%c0_28, %c0_29] : memref<1x128xf32, #tpu.memory_space<vmem>>, vector<1x128xf32>
      %cst_30 = arith.constant 9.99999974E-6 : f32
      %54 = vector.broadcast %cst_30 : f32 to vector<1x128xf32>
      %55 = arith.addf %52, %54 : vector<1x128xf32>
      %56 = math.rsqrt %55 : vector<1x128xf32>
      %57 = arith.mulf %53, %56 : vector<1x128xf32>
      %58 = vector.broadcast %57 : vector<1x128xf32> to vector<32x128xf32>
      %59 = arith.mulf %47, %58 : vector<32x128xf32>
      %c0_31 = arith.constant 0 : index
      %c0_32 = arith.constant 0 : index
      %60 = vector.load %arg7[%c0_31, %c0_32] : memref<1x128xf32, #tpu.memory_space<vmem>>, vector<1x128xf32>
      %61 = vector.broadcast %60 : vector<1x128xf32> to vector<32x128xf32>
      %62 = arith.addf %59, %61 : vector<32x128xf32>
      %c0_33 = arith.constant 0 : index
      %c0_34 = arith.constant 0 : index
      %63 = vector.load %arg8[%c0_33, %c0_34] : memref<32x128xf32, #tpu.memory_space<vmem>>, vector<32x128xf32>
      tpu.vector_store %arg8[%c0_33, %c0_34], %62 {strides = array<i32>} : memref<32x128xf32, #tpu.memory_space<vmem>>, vector<32x128xf32>,
    } else {
    }
    return
  }
  func.func @transform_0(%arg0: i32) -> (i32, i32) {
    %c0_i32 = arith.constant 0 : i32
    %c0_i32_0 = arith.constant 0 : i32
    %c0_i32_1 = arith.constant 0 : i32
    return %c0_i32, %c0_i32_0 : i32, i32
  }
  func.func @transform_1(%arg0: i32) -> (i32, i32) {
    %c0_i32 = arith.constant 0 : i32
    %c0_i32_0 = arith.constant 0 : i32
    return %c0_i32, %arg0 : i32, i32
  }
  func.func @transform_2(%arg0: i32) -> (i32, i32) {
    %c0_i32 = arith.constant 0 : i32
    %c0_i32_0 = arith.constant 0 : i32
    return %c0_i32, %arg0 : i32, i32
  }
  func.func @transform_3(%arg0: i32) -> (i32, i32) {
    %c0_i32 = arith.constant 0 : i32
    %c0_i32_0 = arith.constant 0 : i32
    return %c0_i32, %arg0 : i32, i32
  }
  func.func @transform_4(%arg0: i32) -> (i32, i32) {
    %c0_i32 = arith.constant 0 : i32
    %c0_i32_0 = arith.constant 0 : i32
    return %arg0, %c0_i32 : i32, i32
  }
  func.func @transform_5(%arg0: i32) -> (i32, i32) {
    %c0_i32 = arith.constant 0 : i32
    %c0_i32_0 = arith.constant 0 : i32
    %c0_i32_1 = arith.constant 0 : i32
    return %c0_i32, %c0_i32_0 : i32, i32
  }
  func.func @transform_6(%arg0: i32) -> (i32, i32) {
    %c0_i32 = arith.constant 0 : i32
    %c0_i32_0 = arith.constant 0 : i32
    %c0_i32_1 = arith.constant 0 : i32
    return %c0_i32, %c0_i32_0 : i32, i32
  }
  func.func @transform_7(%arg0: i32) -> (i32, i32) {
    %c0_i32 = arith.constant 0 : i32
    %c0_i32_0 = arith.constant 0 : i32
    %c0_i32_1 = arith.constant 0 : i32
    return %c0_i32, %c0_i32_0 : i32, i32
  }
}

</mosaic_0001>

<llo_original>
// kernel: tpu_custom_call.1
$region0: #{tpu_custom_call.1}
  #allocation0 [shape = 'u32[]', space=smem, size = 0x4, offset = 0x4, fixed_abs, tag = 'smem constant byte address 0x4 - core index']
  #allocation1 [shape = 'u32[144,128]{1,0:T(1,128)}', space=vmem, size = 0x12000, scoped, tag = 'internal scratch']
  %s0 = inlined_call_operand.hbm [shape: f32[32,128], index: 0, kind: input, shape index: {}]
  %s1 = inlined_call_operand.hbm [shape: f32[128,1024], index: 1, kind: input, shape index: {}]
  %s2 = inlined_call_operand.hbm [shape: f32[1,1024], index: 2, kind: input, shape index: {}]
  %s3 = inlined_call_operand.vmem [shape: f32[1,1024], index: 3, kind: input, shape index: {}]
  %s4 = inlined_call_operand.hbm [shape: f32[1024,128], index: 4, kind: input, shape index: {}]
  %s5 = inlined_call_operand.vmem [shape: f32[1,128], index: 5, kind: input, shape index: {}]
  %s6 = inlined_call_operand.vmem [shape: f32[1,128], index: 6, kind: input, shape index: {}]
  %s7 = inlined_call_operand.hbm [shape: f32[32,128], index: 7, kind: output, shape index: {}]
  %s8 = sld [smem:[#allocation0]]
  $region85: #{tpu_custom_call.1} parent=0
    _
  %s10 = ssub.s32 1, %s8
  %s11 = scalar_select 0, %s10, %s8
  $region1: #{tpu_custom_call.1} parent=0
    #allocation2 [shape = 'u8[16384]{0}', space=vmem, size = 0x4000, scoped, tag = 'input window, operand 0, single buffered']
    #allocation3 [shape = 's32[2]{0}', space=sflag, size = 0x8, scoped, tag = 'scoped memory for tpu_custom_call.1']
    #allocation4 [shape = 's32[2]{0}', space=sflag, size = 0x8, scoped, tag = 'scoped memory for tpu_custom_call.1']
    #allocation5 [shape = 'u8[524288]{0}', space=vmem, size = 0x80000, scoped, tag = 'input window, operand 1']
    #allocation6 [shape = 's32[2]{0}', space=sflag, size = 0x8, scoped, tag = 'scoped memory for tpu_custom_call.1']
    #allocation7 [shape = 'u8[4096]{0}', space=vmem, size = 0x1000, scoped, tag = 'input window, operand 2']
    #allocation8 [shape = 'u8[524288]{0}', space=vmem, size = 0x80000, scoped, tag = 'input window, operand 4']
    #allocation9 [shape = 's32[2]{0}', space=sflag, size = 0x8, scoped, tag = 'scoped memory for tpu_custom_call.1']
    #allocation10 [shape = 'u8[16384]{0}', space=vmem, size = 0x4000, scoped, tag = 'output window, operand 0, single buffered']
    %12 = vsyncpa [#allocation3], 0
    %13 = vsyncpa [#allocation6], 0
    %s14 = scalar_lea.sflag [#allocation6], 1
    %15 = vsyncpa %s14, 0
    %16 = vsyncpa [#allocation9], 0
    %s17 = scalar_lea.sflag [#allocation9], 1
    %18 = vsyncpa %s17, 0
    %19 = vsyncpa [#allocation4], 0
    loop: start=0, step=1, limit=4
    $region2: #{tpu_custom_call.1} parent=1 // loop_pre_header
      _
    $region3: #{tpu_custom_call.1} parent=1 // loop_header
      %s21 = sphi 0, %s25
      %p22 = scmp.ge.s32.totalorder %s21, 4
      %s29 = sphi 0, %s29
      %s31 = sphi 0, %s29
      %s32 = sphi 0, %s31
      %s46 = sphi 0, %s32
      %s52 = sphi 0, %s54
      %s55 = sphi 0, %s52
      %s56 = sphi 0, %s55
      %s72 = sphi 0, %s56
      %s78 = sphi 0, %s80
      %s81 = sphi 0, %s78
      %s82 = sphi 0, %s81
      %s98 = sphi 0, %s82
      %s104 = sphi 0, %s106
      %s107 = sphi 0, %s104
      %s108 = sphi 0, %s107
      %s124 = sphi 0, %s108
      %s130 = sphi 0, %s132
      %s133 = sphi 0, %s130
      %s134 = sphi 0, %s133
      %s150 = sphi 0, %s134
      %s154 = sphi 0, %s154
      %s156 = sphi 0, %s154
      %s157 = sphi 0, %s156
      %s171 = sphi 0, %s157
      %s175 = sphi 0, %s175
      %s177 = sphi 0, %s175
      %s178 = sphi 0, %s177
      %s192 = sphi 0, %s178
      %s196 = sphi 0, %s196
      %s198 = sphi 0, %s196
      %s199 = sphi 0, %s198
      %s213 = sphi 0, %s199
    $region4: #{tpu_custom_call.1} parent=1 // loop_header_branch
      %24 = sbr.rel (%p22) target = $region8
    $region5: #{tpu_custom_call.1} parent=1 // loop_body
      %s26 = ssub.s32 %s21, 1
      %s27 = ssub.s32 %s21, 2
      %s28 = sadd.s32 %s21, 1
      %s30 = sadd.s32 %s29, 1
      %p33 = scmp.eq.s32.totalorder %s21, 1
      %p34 = scmp.ne.s32.totalorder %s29, %s31
      %p35 = scmp.eq.s32.totalorder %s21, 0
      %p36 = por %p34, %p35
      %p37 = scmp.ne.s32.totalorder %s29, %s31
      %p38 = scmp.eq.s32.totalorder %s26, 1
      %p39 = por %p37, %p38
      %p40 = scmp.ne.s32.totalorder %s31, %s32
      %p41 = scmp.eq.s32.totalorder %s26, 0
      %p42 = por %p40, %p41
      %p43 = scmp.ne.s32.totalorder %s31, %s32
      %p44 = scmp.eq.s32.totalorder %s27, 1
      %p45 = por %p43, %p44
      %p47 = scmp.ne.s32.totalorder %s32, %s46
      %p48 = scmp.eq.s32.totalorder %s27, 0
      %p49 = por %p47, %p48
      %s50 = ssub.s32 %s21, %s28
      %p51 = scmp.eq.s32.totalorder %s50, 0
      %s53 = sadd.s32 %s52, 1
      %s54 = scalar_select %p51, %s52, %s53
      %p57 = pneg %p51
      %p58 = scmp.eq.s32.totalorder %s21, 1
      %p59 = por %p57, %p58
      %p60 = scmp.ne.s32.totalorder %s52, %s55
      %p61 = scmp.eq.s32.totalorder %s21, 0
      %p62 = por %p60, %p61
      %p63 = scmp.ne.s32.totalorder %s52, %s55
      %p64 = scmp.eq.s32.totalorder %s26, 1
      %p65 = por %p63, %p64
      %p66 = scmp.ne.s32.totalorder %s55, %s56
      %p67 = scmp.eq.s32.totalorder %s26, 0
      %p68 = por %p66, %p67
      %p69 = scmp.ne.s32.totalorder %s55, %s56
      %p70 = scmp.eq.s32.totalorder %s27, 1
      %p71 = por %p69, %p70
      %p73 = scmp.ne.s32.totalorder %s56, %s72
      %p74 = scmp.eq.s32.totalorder %s27, 0
      %p75 = por %p73, %p74
      %s76 = ssub.s32 %s21, %s28
      %p77 = scmp.eq.s32.totalorder %s76, 0
      %s79 = sadd.s32 %s78, 1
      %s80 = scalar_select %p77, %s78, %s79
      %p83 = pneg %p77
      %p84 = scmp.eq.s32.totalorder %s21, 1
      %p85 = por %p83, %p84
      %p86 = scmp.ne.s32.totalorder %s78, %s81
      %p87 = scmp.eq.s32.totalorder %s21, 0
      %p88 = por %p86, %p87
      %p89 = scmp.ne.s32.totalorder %s78, %s81
      %p90 = scmp.eq.s32.totalorder %s26, 1
      %p91 = por %p89, %p90
      %p92 = scmp.ne.s32.totalorder %s81, %s82
      %p93 = scmp.eq.s32.totalorder %s26, 0
      %p94 = por %p92, %p93
      %p95 = scmp.ne.s32.totalorder %s81, %s82
      %p96 = scmp.eq.s32.totalorder %s27, 1
      %p97 = por %p95, %p96
      %p99 = scmp.ne.s32.totalorder %s82, %s98
      %p100 = scmp.eq.s32.totalorder %s27, 0
      %p101 = por %p99, %p100
      %s102 = ssub.s32 %s21, %s28
      %p103 = scmp.eq.s32.totalorder %s102, 0
      %s105 = sadd.s32 %s104, 1
      %s106 = scalar_select %p103, %s104, %s105
      %p109 = pneg %p103
      %p110 = scmp.eq.s32.totalorder %s21, 1
      %p111 = por %p109, %p110
      %p112 = scmp.ne.s32.totalorder %s104, %s107
      %p113 = scmp.eq.s32.totalorder %s21, 0
      %p114 = por %p112, %p113
      %p115 = scmp.ne.s32.totalorder %s104, %s107
      %p116 = scmp.eq.s32.totalorder %s26, 1
      %p117 = por %p115, %p116
      %p118 = scmp.ne.s32.totalorder %s107, %s108
      %p119 = scmp.eq.s32.totalorder %s26, 0
      %p120 = por %p118, %p119
      %p121 = scmp.ne.s32.totalorder %s107, %s108
      %p122 = scmp.eq.s32.totalorder %s27, 1
      %p123 = por %p121, %p122
      %p125 = scmp.ne.s32.totalorder %s108, %s124
      %p126 = scmp.eq.s32.totalorder %s27, 0
      %p127 = por %p125, %p126
      %s128 = ssub.s32 %s21, %s28
      %p129 = scmp.eq.s32.totalorder %s128, 0
      %s131 = sadd.s32 %s130, 1
      %s132 = scalar_select %p129, %s130, %s131
      %p135 = pneg %p129
      %p136 = scmp.eq.s32.totalorder %s21, 1
      %p137 = por %p135, %p136
      %p138 = scmp.ne.s32.totalorder %s130, %s133
      %p139 = scmp.eq.s32.totalorder %s21, 0
      %p140 = por %p138, %p139
      %p141 = scmp.ne.s32.totalorder %s130, %s133
      %p142 = scmp.eq.s32.totalorder %s26, 1
      %p143 = por %p141, %p142
      %p144 = scmp.ne.s32.totalorder %s133, %s134
      %p145 = scmp.eq.s32.totalorder %s26, 0
      %p146 = por %p144, %p145
      %p147 = scmp.ne.s32.totalorder %s133, %s134
      %p148 = scmp.eq.s32.totalorder %s27, 1
      %p149 = por %p147, %p148
      %p151 = scmp.ne.s32.totalorder %s134, %s150
      %p152 = scmp.eq.s32.totalorder %s27, 0
      %p153 = por %p151, %p152
      %s155 = sadd.s32 %s154, 1
      %p158 = scmp.eq.s32.totalorder %s21, 1
      %p159 = scmp.ne.s32.totalorder %s154, %s156
      %p160 = scmp.eq.s32.totalorder %s21, 0
      %p161 = por %p159, %p160
      %p162 = scmp.ne.s32.totalorder %s154, %s156
      %p163 = scmp.eq.s32.totalorder %s26, 1
      %p164 = por %p162, %p163
      %p165 = scmp.ne.s32.totalorder %s156, %s157
      %p166 = scmp.eq.s32.totalorder %s26, 0
      %p167 = por %p165, %p166
      %p168 = scmp.ne.s32.totalorder %s156, %s157
      %p169 = scmp.eq.s32.totalorder %s27, 1
      %p170 = por %p168, %p169
      %p172 = scmp.ne.s32.totalorder %s157, %s171
      %p173 = scmp.eq.s32.totalorder %s27, 0
      %p174 = por %p172, %p173
      %s176 = sadd.s32 %s175, 1
      %p179 = scmp.eq.s32.totalorder %s21, 1
      %p180 = scmp.ne.s32.totalorder %s175, %s177
      %p181 = scmp.eq.s32.totalorder %s21, 0
      %p182 = por %p180, %p181
      %p183 = scmp.ne.s32.totalorder %s175, %s177
      %p184 = scmp.eq.s32.totalorder %s26, 1
      %p185 = por %p183, %p184
      %p186 = scmp.ne.s32.totalorder %s177, %s178
      %p187 = scmp.eq.s32.totalorder %s26, 0
      %p188 = por %p186, %p187
      %p189 = scmp.ne.s32.totalorder %s177, %s178
      %p190 = scmp.eq.s32.totalorder %s27, 1
      %p191 = por %p189, %p190
      %p193 = scmp.ne.s32.totalorder %s178, %s192
      %p194 = scmp.eq.s32.totalorder %s27, 0
      %p195 = por %p193, %p194
      %s197 = sadd.s32 %s196, 1
      %p200 = scmp.eq.s32.totalorder %s21, 1
      %p201 = scmp.ne.s32.totalorder %s196, %s198
      %p202 = scmp.eq.s32.totalorder %s21, 0
      %p203 = por %p201, %p202
      %p204 = scmp.ne.s32.totalorder %s196, %s198
      %p205 = scmp.eq.s32.totalorder %s26, 1
      %p206 = por %p204, %p205
      %p207 = scmp.ne.s32.totalorder %s198, %s199
      %p208 = scmp.eq.s32.totalorder %s26, 0
      %p209 = por %p207, %p208
      %p210 = scmp.ne.s32.totalorder %s198, %s199
      %p211 = scmp.eq.s32.totalorder %s27, 1
      %p212 = por %p210, %p211
      %p214 = scmp.ne.s32.totalorder %s199, %s213
      %p215 = scmp.eq.s32.totalorder %s27, 0
      %p216 = por %p214, %p215
      %p217 = scmp.le.s32.totalorder 1, %s21
      %p218 = scmp.lt.s32.totalorder %s21, 3
      %p219 = pnand %p217, %p218
      %p220 = pneg %p219
      // Predicated region
      $region9: #{tpu_custom_call.1} parent=5 // pred_check
        _
      $region10: #{tpu_custom_call.1} parent=5 // pred_check_branch
        %222 = sbr.rel (%p219) target = $region12
      $region11: #{tpu_custom_call.1} parent=5 // pred_region
        %s223 = ssub.s32 %s21, 1
        // Predicated region
        $region13: #{tpu_custom_call.1} parent=11 // pred_check
          %p224 = pneg %p42
        $region14: #{tpu_custom_call.1} parent=11 // pred_check_branch
          %226 = sbr.rel (%p224) target = $region16
        $region15: #{tpu_custom_call.1} parent=11 // pred_region
          %s228 = ssub.s32 512, 512
          %229 = vsyncadd [#allocation3], %s228
          %s230 = sshll.u32 [#allocation2], 4
          %s231 = int_to_ptr.vmem [resolvable:$true] %s230
          %236 = dma.hbm_to_vmem [thread:$0]  %s0, 512, %s231, [#allocation3], 128, 128, 8
        $region16: #{tpu_custom_call.1} parent=11 // pred_fallthru
          _
        // Predicated region
        $region17: #{tpu_custom_call.1} parent=11 // pred_check
          %p237 = pneg %p167
        $region18: #{tpu_custom_call.1} parent=11 // pred_check_branch
          %239 = sbr.rel (%p237) target = $region20
        $region19: #{tpu_custom_call.1} parent=11 // pred_region
          _
        $region20: #{tpu_custom_call.1} parent=11 // pred_fallthru
          _
        // Predicated region
        $region21: #{tpu_custom_call.1} parent=11 // pred_check
          %p240 = pneg %p188
        $region22: #{tpu_custom_call.1} parent=11 // pred_check_branch
          %242 = sbr.rel (%p240) target = $region24
        $region23: #{tpu_custom_call.1} parent=11 // pred_region
          _
        $region24: #{tpu_custom_call.1} parent=11 // pred_fallthru
          _
      $region12: #{tpu_custom_call.1} parent=5 // pred_fallthru
        _
      %p243 = scmp.lt.s32.totalorder %s21, 2
      // Predicated region
      $region25: #{tpu_custom_call.1} parent=5 // pred_check
        %p244 = pneg %p243
      $region26: #{tpu_custom_call.1} parent=5 // pred_check_branch
        %246 = sbr.rel (%p244) target = $region28
      $region27: #{tpu_custom_call.1} parent=5 // pred_region
        // Predicated region
        $region29: #{tpu_custom_call.1} parent=27 // pred_check
          %p247 = pneg %p62
        $region30: #{tpu_custom_call.1} parent=27 // pred_check_branch
          %249 = sbr.rel (%p247) target = $region32
        $region31: #{tpu_custom_call.1} parent=27 // pred_region
          %s250 = sand.u32 %s21, 1
          %s251 = scalar_lea.sflag [#allocation6], %s250
          %s252 = sand.u32 %s52, 1
          %s253 = smul.addr %s252, 512
          %s254 = scalar_lea.vmem [#allocation5], %s253
          %s255 = smul.u32 4, %s21
          %s257 = ssub.s32 8192, 8192
          %258 = vsyncadd %s251, %s257
          %s259 = smul.addr %s255, 128
          %s260 = scalar_lea.hbm %s1, %s259
          %s261 = sshll.u32 %s254, 4
          %s262 = int_to_ptr.vmem [resolvable:$true] %s261
          %267 = dma.hbm_to_vmem [thread:$0]  %s260, 8192, %s262, %s251, 1024, 512, 32
        $region32: #{tpu_custom_call.1} parent=27 // pred_fallthru
          _
        // Predicated region
        $region33: #{tpu_custom_call.1} parent=27 // pred_check
          %p268 = pneg %p88
        $region34: #{tpu_custom_call.1} parent=27 // pred_check_branch
          %270 = sbr.rel (%p268) target = $region36
        $region35: #{tpu_custom_call.1} parent=27 // pred_region
          %s271 = sand.u32 %s21, 1
          %s272 = scalar_lea.sflag [#allocation6], %s271
          %s273 = sand.u32 %s78, 1
          %s274 = smul.addr %s273, 4
          %s275 = scalar_lea.vmem [#allocation7], %s274
          %s276 = smul.u32 4, %s21
          %s278 = ssub.s32 64, 64
          %279 = vsyncadd %s272, %s278
          %s280 = smul.addr %s276, 16
          %s281 = scalar_lea.hbm %s2, %s280
          %s283 = sshll.u32 %s275, 4
          %s284 = int_to_ptr.vmem [resolvable:$true] %s283
          %286 = dma.hbm_to_vmem [thread:$0]  %s281, 64, %s284, %s272
        $region36: #{tpu_custom_call.1} parent=27 // pred_fallthru
          _
        // Predicated region
        $region37: #{tpu_custom_call.1} parent=27 // pred_check
          %p287 = pneg %p114
        $region38: #{tpu_custom_call.1} parent=27 // pred_check_branch
          %289 = sbr.rel (%p287) target = $region40
        $region39: #{tpu_custom_call.1} parent=27 // pred_region
          %s290 = smul.u32 4, %s21
          %p291 = scmp.lt.s32.totalorder %s290, 7
          %s292 = scalar_select %p291, %s290, 7
          %s293 = scalar_lea.vmem %s3, %s292
          %s294 = smul.u32 4, %s21
        $region40: #{tpu_custom_call.1} parent=27 // pred_fallthru
          _
        // Predicated region
        $region41: #{tpu_custom_call.1} parent=27 // pred_check
          %p295 = pneg %p140
        $region42: #{tpu_custom_call.1} parent=27 // pred_check_branch
          %297 = sbr.rel (%p295) target = $region44
        $region43: #{tpu_custom_call.1} parent=27 // pred_region
          %s298 = sand.u32 %s130, 1
          %s299 = scalar_lea.sflag [#allocation9], %s298
          %s300 = sand.u32 %s130, 1
          %s301 = smul.addr %s300, 512
          %s302 = scalar_lea.vmem [#allocation8], %s301
          %s303 = smul.u32 64, %s21
          %s305 = ssub.s32 8192, 8192
          %306 = vsyncadd %s299, %s305
          %s307 = smul.addr %s303, 128
          %s308 = scalar_lea.hbm %s4, %s307
          %s309 = sshll.u32 %s302, 4
          %s310 = int_to_ptr.vmem [resolvable:$true] %s309
          %315 = dma.hbm_to_vmem [thread:$0]  %s308, 8192, %s310, %s299, 128, 128, 8
        $region44: #{tpu_custom_call.1} parent=27 // pred_fallthru
          _
      $region28: #{tpu_custom_call.1} parent=5 // pred_fallthru
        _
      %p316 = scmp.le.s32.totalorder 1, %s21
      %p317 = scmp.lt.s32.totalorder %s21, 3
      %p318 = pnand %p316, %p317
      %p319 = pneg %p318
      // Predicated region
      $region45: #{tpu_custom_call.1} parent=5 // pred_check
        _
      $region46: #{tpu_custom_call.1} parent=5 // pred_check_branch
        %321 = sbr.rel (%p318) target = $region48
      $region47: #{tpu_custom_call.1} parent=5 // pred_region
        %s322 = ssub.s32 %s21, 1
        // Predicated region
        $region49: #{tpu_custom_call.1} parent=47 // pred_check
          %p323 = pneg %p42
        $region50: #{tpu_custom_call.1} parent=47 // pred_check_branch
          %325 = sbr.rel (%p323) target = $region52
        $region51: #{tpu_custom_call.1} parent=47 // pred_region
          %326 = dma.done [#allocation3], 512
        $region52: #{tpu_custom_call.1} parent=47 // pred_fallthru
          _
        %s327 = sand.u32 %s26, 1
        %s328 = scalar_lea.sflag [#allocation6], %s327
        %s329 = sand.u32 %s55, 1
        %s330 = smul.addr %s329, 512
        %s331 = scalar_lea.vmem [#allocation5], %s330
        // Predicated region
        $region53: #{tpu_custom_call.1} parent=47 // pred_check
          %p332 = pneg %p68
        $region54: #{tpu_custom_call.1} parent=47 // pred_check_branch
          %334 = sbr.rel (%p332) target = $region56
        $region55: #{tpu_custom_call.1} parent=47 // pred_region
          %335 = dma.done %s328, 8192
        $region56: #{tpu_custom_call.1} parent=47 // pred_fallthru
          _
        %s336 = sand.u32 %s26, 1
        %s337 = scalar_lea.sflag [#allocation6], %s336
        %s338 = sand.u32 %s81, 1
        %s339 = smul.addr %s338, 4
        %s340 = scalar_lea.vmem [#allocation7], %s339
        // Predicated region
        $region57: #{tpu_custom_call.1} parent=47 // pred_check
          %p341 = pneg %p94
        $region58: #{tpu_custom_call.1} parent=47 // pred_check_branch
          %343 = sbr.rel (%p341) target = $region60
        $region59: #{tpu_custom_call.1} parent=47 // pred_region
          %344 = dma.done %s337, 64
        $region60: #{tpu_custom_call.1} parent=47 // pred_fallthru
          _
        %s345 = sand.u32 %s133, 1
        %s346 = scalar_lea.sflag [#allocation9], %s345
        %s347 = sand.u32 %s133, 1
        %s348 = smul.addr %s347, 512
        %s349 = scalar_lea.vmem [#allocation8], %s348
        // Predicated region
        $region61: #{tpu_custom_call.1} parent=47 // pred_check
          %p350 = pneg %p146
        $region62: #{tpu_custom_call.1} parent=47 // pred_check_branch
          %352 = sbr.rel (%p350) target = $region64
        $region63: #{tpu_custom_call.1} parent=47 // pred_region
          %353 = dma.done %s346, 8192
        $region64: #{tpu_custom_call.1} parent=47 // pred_fallthru
          _
        %p354 = pneg %p42
        %p355 = pneg %p39
        %s356 = sand.u32 %s26, 1
        %s357 = scalar_lea.sflag [#allocation6], %s356
        %s358 = sand.u32 %s55, 1
        %s359 = smul.addr %s358, 512
        %s360 = scalar_lea.vmem [#allocation5], %s359
        %p361 = pneg %p68
        %p362 = pneg %p65
        %s363 = sand.u32 %s26, 1
        %s364 = scalar_lea.sflag [#allocation6], %s363
        %s365 = sand.u32 %s81, 1
        %s366 = smul.addr %s365, 4
        %s367 = scalar_lea.vmem [#allocation7], %s366
        %p368 = pneg %p94
        %p369 = pneg %p91
        %s370 = smul.u32 4, %s26
        %p371 = scmp.lt.s32.totalorder %s370, 7
        %s372 = scalar_select %p371, %s370, 7
        %s373 = scalar_lea.vmem %s3, %s372
        %p374 = pneg %p120
        %p375 = pneg %p117
        %s376 = sand.u32 %s133, 1
        %s377 = scalar_lea.sflag [#allocation9], %s376
        %s378 = sand.u32 %s133, 1
        %s379 = smul.addr %s378, 512
        %s380 = scalar_lea.vmem [#allocation8], %s379
        %p381 = pneg %p146
        %p382 = pneg %p143
        %p383 = pneg %p167
        %p384 = pneg %p164
        %p385 = pneg %p188
        %p386 = pneg %p185
        %p387 = pneg %p209
        %p388 = pneg %p206
        %s389 = smul.u32 4, %s26
        %s390 = smul.u32 4, %s26
        %s391 = smul.u32 4, %s26
        %p392 = scmp.lt.s32.totalorder %s391, 7
        %s393 = scalar_select %p392, %s391, 7
        %s394 = scalar_lea.vmem %s3, %s393
        %s395 = smul.u32 4, %s26
        %s396 = smul.u32 64, %s26
        %p398 = scmp.eq.s32.totalorder %s26, 0
        // Predicated region
        $region65: #{tpu_custom_call.1} parent=47 // pred_check
          %p399 = pneg %p398
        $region66: #{tpu_custom_call.1} parent=47 // pred_check_branch
          %401 = sbr.rel (%p399) target = $region68
        $region67: #{tpu_custom_call.1} parent=47 // pred_region
          %402 = vst [vmem:[#allocation10] sm:$0xff] 0.0
          %403 = vst [vmem:[#allocation10 + $0x8] sm:$0xff] 0.0
          %404 = vst [vmem:[#allocation10 + $0x10] sm:$0xff] 0.0
          %405 = vst [vmem:[#allocation10 + $0x18] sm:$0xff] 0.0
        $region68: #{tpu_custom_call.1} parent=47 // pred_fallthru
          _
        %v406 = vld [vmem:[#allocation2] sm:$0xff]
        %v407 = vld [vmem:[#allocation2 + $0x8] sm:$0xff]
        %v408 = vld [vmem:[#allocation2 + $0x10] sm:$0xff]
        %v409 = vld [vmem:[#allocation2 + $0x18] sm:$0xff]
        %v410 = vpack.c.bf16 %v407, %v406
        %v411 = vpack.c.bf16 %v409, %v408
        %v412 = vld [vmem:[%s331] sm:$0xff]
        %v413 = vld [vmem:[%s331 + $0x8] sm:$0xff]
        %v414 = vld [vmem:[%s331 + $0x10] sm:$0xff]
        %v415 = vld [vmem:[%s331 + $0x18] sm:$0xff]
        %v416 = vld [vmem:[%s331 + $0x20] sm:$0xff]
        %v417 = vld [vmem:[%s331 + $0x28] sm:$0xff]
        %v418 = vld [vmem:[%s331 + $0x30] sm:$0xff]
        %v419 = vld [vmem:[%s331 + $0x38] sm:$0xff]
        %v420 = vld [vmem:[%s331 + $0x40] sm:$0xff]
        %v421 = vld [vmem:[%s331 + $0x48] sm:$0xff]
        %v422 = vld [vmem:[%s331 + $0x50] sm:$0xff]
        %v423 = vld [vmem:[%s331 + $0x58] sm:$0xff]
        %v424 = vld [vmem:[%s331 + $0x60] sm:$0xff]
        %v425 = vld [vmem:[%s331 + $0x68] sm:$0xff]
        %v426 = vld [vmem:[%s331 + $0x70] sm:$0xff]
        %v427 = vld [vmem:[%s331 + $0x78] sm:$0xff]
        %v428 = vld [vmem:[%s331 + $0x80] sm:$0xff]
        %v429 = vld [vmem:[%s331 + $0x88] sm:$0xff]
        %v430 = vld [vmem:[%s331 + $0x90] sm:$0xff]
        %v431 = vld [vmem:[%s331 + $0x98] sm:$0xff]
        %v432 = vld [vmem:[%s331 + $0xa0] sm:$0xff]
        %v433 = vld [vmem:[%s331 + $0xa8] sm:$0xff]
        %v434 = vld [vmem:[%s331 + $0xb0] sm:$0xff]
        %v435 = vld [vmem:[%s331 + $0xb8] sm:$0xff]
        %v436 = vld [vmem:[%s331 + $0xc0] sm:$0xff]
        %v437 = vld [vmem:[%s331 + $0xc8] sm:$0xff]
        %v438 = vld [vmem:[%s331 + $0xd0] sm:$0xff]
        %v439 = vld [vmem:[%s331 + $0xd8] sm:$0xff]
        %v440 = vld [vmem:[%s331 + $0xe0] sm:$0xff]
        %v441 = vld [vmem:[%s331 + $0xe8] sm:$0xff]
        %v442 = vld [vmem:[%s331 + $0xf0] sm:$0xff]
        %v443 = vld [vmem:[%s331 + $0xf8] sm:$0xff]
        %v444 = vld [vmem:[%s331 + $0x100] sm:$0xff]
        %v445 = vld [vmem:[%s331 + $0x108] sm:$0xff]
        %v446 = vld [vmem:[%s331 + $0x110] sm:$0xff]
        %v447 = vld [vmem:[%s331 + $0x118] sm:$0xff]
        %v448 = vld [vmem:[%s331 + $0x120] sm:$0xff]
        %v449 = vld [vmem:[%s331 + $0x128] sm:$0xff]
        %v450 = vld [vmem:[%s331 + $0x130] sm:$0xff]
        %v451 = vld [vmem:[%s331 + $0x138] sm:$0xff]
        %v452 = vld [vmem:[%s331 + $0x140] sm:$0xff]
        %v453 = vld [vmem:[%s331 + $0x148] sm:$0xff]
        %v454 = vld [vmem:[%s331 + $0x150] sm:$0xff]
        %v455 = vld [vmem:[%s331 + $0x158] sm:$0xff]
        %v456 = vld [vmem:[%s331 + $0x160] sm:$0xff]
        %v457 = vld [vmem:[%s331 + $0x168] sm:$0xff]
        %v458 = vld [vmem:[%s331 + $0x170] sm:$0xff]
        %v459 = vld [vmem:[%s331 + $0x178] sm:$0xff]
        %v460 = vld [vmem:[%s331 + $0x180] sm:$0xff]
        %v461 = vld [vmem:[%s331 + $0x188] sm:$0xff]
        %v462 = vld [vmem:[%s331 + $0x190] sm:$0xff]
        %v463 = vld [vmem:[%s331 + $0x198] sm:$0xff]
        %v464 = vld [vmem:[%s331 + $0x1a0] sm:$0xff]
        %v465 = vld [vmem:[%s331 + $0x1a8] sm:$0xff]
        %v466 = vld [vmem:[%s331 + $0x1b0] sm:$0xff]
        %v467 = vld [vmem:[%s331 + $0x1b8] sm:$0xff]
        %v468 = vld [vmem:[%s331 + $0x1c0] sm:$0xff]
        %v469 = vld [vmem:[%s331 + $0x1c8] sm:$0xff]
        %v470 = vld [vmem:[%s331 + $0x1d0] sm:$0xff]
        %v471 = vld [vmem:[%s331 + $0x1d8] sm:$0xff]
        %v472 = vld [vmem:[%s331 + $0x1e0] sm:$0xff]
        %v473 = vld [vmem:[%s331 + $0x1e8] sm:$0xff]
        %v474 = vld [vmem:[%s331 + $0x1f0] sm:$0xff]
        %v475 = vld [vmem:[%s331 + $0x1f8] sm:$0xff]
        %v476 = vpack.c.bf16 %v416, %v412
        %v477 = vpack.c.bf16 %v417, %v413
        %v478 = vpack.c.bf16 %v418, %v414
        %v479 = vpack.c.bf16 %v419, %v415
        %v480 = vpack.c.bf16 %v424, %v420
        %v481 = vpack.c.bf16 %v425, %v421
        %v482 = vpack.c.bf16 %v426, %v422
        %v483 = vpack.c.bf16 %v427, %v423
        %v484 = vpack.c.bf16 %v432, %v428
        %v485 = vpack.c.bf16 %v433, %v429
        %v486 = vpack.c.bf16 %v434, %v430
        %v487 = vpack.c.bf16 %v435, %v431
        %v488 = vpack.c.bf16 %v440, %v436
        %v489 = vpack.c.bf16 %v441, %v437
        %v490 = vpack.c.bf16 %v442, %v438
        %v491 = vpack.c.bf16 %v443, %v439
        %v492 = vpack.c.bf16 %v448, %v444
        %v493 = vpack.c.bf16 %v449, %v445
        %v494 = vpack.c.bf16 %v450, %v446
        %v495 = vpack.c.bf16 %v451, %v447
        %v496 = vpack.c.bf16 %v456, %v452
        %v497 = vpack.c.bf16 %v457, %v453
        %v498 = vpack.c.bf16 %v458, %v454
        %v499 = vpack.c.bf16 %v459, %v455
        %v500 = vpack.c.bf16 %v464, %v460
        %v501 = vpack.c.bf16 %v465, %v461
        %v502 = vpack.c.bf16 %v466, %v462
        %v503 = vpack.c.bf16 %v467, %v463
        %v504 = vpack.c.bf16 %v472, %v468
        %v505 = vpack.c.bf16 %v473, %v469
        %v506 = vpack.c.bf16 %v474, %v470
        %v507 = vpack.c.bf16 %v475, %v471
        %508 = vmatprep.subr.bf16.mxu0 %v477
        %509 = vmatpush1.bf16.msra.mxu0 %v476
        %510 = vmatprep.subr.bf16.mxu0 %v481
        %511 = vmatpush1.bf16.msra.mxu0 %v480
        %512 = vmatprep.subr.bf16.mxu0 %v485
        %513 = vmatpush1.bf16.msra.mxu0 %v484
        %514 = vmatprep.subr.bf16.mxu0 %v489
        %515 = vmatpush1.bf16.msra.mxu0 %v488
        %516 = vmatprep.subr.bf16.mxu0 %v493
        %517 = vmatpush1.bf16.msra.mxu0 %v492
        %518 = vmatprep.subr.bf16.mxu0 %v497
        %519 = vmatpush1.bf16.msra.mxu0 %v496
        %520 = vmatprep.subr.bf16.mxu0 %v501
        %521 = vmatpush1.bf16.msra.mxu0 %v500
        %522 = vmatprep.subr.bf16.mxu0 %v505
        %523 = vmatpush1.bf16.msra.mxu0 %v504
        %524 = vmatprep.subr.bf16.mxu0 0
        %525 = vmatpush1.bf16.msra.mxu0 0
        %526 = vmatprep.subr.bf16.mxu0 0
        %527 = vmatpush1.bf16.msra.mxu0 0
        %528 = vmatprep.subr.bf16.mxu0 0
        %529 = vmatpush1.bf16.msra.mxu0 0
        %530 = vmatprep.subr.bf16.mxu0 0
        %531 = vmatpush1.bf16.msra.mxu0 0
        %532 = vmatprep.subr.bf16.mxu0 0
        %533 = vmatpush1.bf16.msra.mxu0 0
        %534 = vmatprep.subr.bf16.mxu0 0
        %535 = vmatpush1.bf16.msra.mxu0 0
        %536 = vmatprep.subr.bf16.mxu0 0
        %537 = vmatpush1.bf16.msra.mxu0 0
        %538 = vmatprep.subr.bf16.mxu0 0
        %539 = vmatpush1.bf16.msra.mxu0 0
        %540 = vmatprep.mubr.bf16.mxu0 0
        %541 = vmatmul.mubr.bf16.gmra.mrb[0].mxu0 %v410
        %v542 = vpop.f32.mrb[0].mxu0
        %v543 = vadd.f32 0.0, %v542
        %v544 = vpop.f32.mrb[0].mxu0
        %v545 = vadd.f32 0.0, %v544
        %v546 = vpop.f32.mrb[0].mxu0
        %v547 = vadd.f32 0.0, %v546
        %v548 = vpop.f32.mrb[0].mxu0
        %v549 = vadd.f32 0.0, %v548
        %550 = vmatprep.mubr.bf16.mxu0 0
        %551 = vmatmul.mubr.bf16.gmra.mrb[0].mxu0 %v411
        %v552 = vpop.f32.mrb[0].mxu0
        %v553 = vadd.f32 0.0, %v552
        %v554 = vpop.f32.mrb[0].mxu0
        %v555 = vadd.f32 0.0, %v554
        %v556 = vpop.f32.mrb[0].mxu0
        %v557 = vadd.f32 0.0, %v556
        %v558 = vpop.f32.mrb[0].mxu0
        %v559 = vadd.f32 0.0, %v558
        %560 = vdwg.mxu0
        %561 = vmatprep.subr.bf16.mxu0 %v479
        %562 = vmatpush1.bf16.msra.mxu0 %v478
        %563 = vmatprep.subr.bf16.mxu0 %v483
        %564 = vmatpush1.bf16.msra.mxu0 %v482
        %565 = vmatprep.subr.bf16.mxu0 %v487
        %566 = vmatpush1.bf16.msra.mxu0 %v486
        %567 = vmatprep.subr.bf16.mxu0 %v491
        %568 = vmatpush1.bf16.msra.mxu0 %v490
        %569 = vmatprep.subr.bf16.mxu0 %v495
        %570 = vmatpush1.bf16.msra.mxu0 %v494
        %571 = vmatprep.subr.bf16.mxu0 %v499
        %572 = vmatpush1.bf16.msra.mxu0 %v498
        %573 = vmatprep.subr.bf16.mxu0 %v503
        %574 = vmatpush1.bf16.msra.mxu0 %v502
        %575 = vmatprep.subr.bf16.mxu0 %v507
        %576 = vmatpush1.bf16.msra.mxu0 %v506
        %577 = vmatprep.subr.bf16.mxu0 0
        %578 = vmatpush1.bf16.msra.mxu0 0
        %579 = vmatprep.subr.bf16.mxu0 0
        %580 = vmatpush1.bf16.msra.mxu0 0
        %581 = vmatprep.subr.bf16.mxu0 0
        %582 = vmatpush1.bf16.msra.mxu0 0
        %583 = vmatprep.subr.bf16.mxu0 0
        %584 = vmatpush1.bf16.msra.mxu0 0
        %585 = vmatprep.subr.bf16.mxu0 0
        %586 = vmatpush1.bf16.msra.mxu0 0
        %587 = vmatprep.subr.bf16.mxu0 0
        %588 = vmatpush1.bf16.msra.mxu0 0
        %589 = vmatprep.subr.bf16.mxu0 0
        %590 = vmatpush1.bf16.msra.mxu0 0
        %591 = vmatprep.subr.bf16.mxu0 0
        %592 = vmatpush1.bf16.msra.mxu0 0
        %593 = vmatprep.mubr.bf16.mxu0 0
        %594 = vmatmul.mubr.bf16.gmra.mrb[0].mxu0 %v410
        %v595 = vpop.f32.mrb[0].mxu0
        %v596 = vadd.f32 0.0, %v595
        %v597 = vpop.f32.mrb[0].mxu0
        %v598 = vadd.f32 0.0, %v597
        %v599 = vpop.f32.mrb[0].mxu0
        %v600 = vadd.f32 0.0, %v599
        %v601 = vpop.f32.mrb[0].mxu0
        %v602 = vadd.f32 0.0, %v601
        %603 = vmatprep.mubr.bf16.mxu0 0
        %604 = vmatmul.mubr.bf16.gmra.mrb[0].mxu0 %v411
        %v605 = vpop.f32.mrb[0].mxu0
        %v606 = vadd.f32 0.0, %v605
        %v607 = vpop.f32.mrb[0].mxu0
        %v608 = vadd.f32 0.0, %v607
        %v609 = vpop.f32.mrb[0].mxu0
        %v610 = vadd.f32 0.0, %v609
        %v611 = vpop.f32.mrb[0].mxu0
        %v612 = vadd.f32 0.0, %v611
        %613 = vdwg.mxu0
        %v614 = vadd.f32 %v543, %v547
        %v615 = vadd.f32 %v614, %v553
        %v616 = vadd.f32 %v615, %v557
        %v617 = vrot.slane %v616, 4
        %v618 = vadd.f32 %v616, %v617
        %v619 = vrot.slane %v618, 2
        %v620 = vadd.f32 %v618, %v619
        %v621 = vrot.slane %v620, 1
        %v622 = vadd.f32 %v620, %v621
        %v623 = vadd.f32 %v545, %v549
        %v624 = vadd.f32 %v623, %v555
        %v625 = vadd.f32 %v624, %v559
        %v626 = vrot.slane %v625, 4
        %v627 = vadd.f32 %v625, %v626
        %v628 = vrot.slane %v627, 2
        %v629 = vadd.f32 %v627, %v628
        %v630 = vrot.slane %v629, 1
        %v631 = vadd.f32 %v629, %v630
        %v632 = vadd.f32 %v596, %v600
        %v633 = vadd.f32 %v632, %v606
        %v634 = vadd.f32 %v633, %v610
        %v635 = vrot.slane %v634, 4
        %v636 = vadd.f32 %v634, %v635
        %v637 = vrot.slane %v636, 2
        %v638 = vadd.f32 %v636, %v637
        %v639 = vrot.slane %v638, 1
        %v640 = vadd.f32 %v638, %v639
        %v641 = vadd.f32 %v598, %v602
        %v642 = vadd.f32 %v641, %v608
        %v643 = vadd.f32 %v642, %v612
        %v644 = vrot.slane %v643, 4
        %v645 = vadd.f32 %v643, %v644
        %v646 = vrot.slane %v645, 2
        %v647 = vadd.f32 %v645, %v646
        %v648 = vrot.slane %v647, 1
        %v649 = vadd.f32 %v647, %v648
        %v650 = vmul.f32 %v622, 0.03125
        %v651 = vmul.f32 %v631, 0.03125
        %v652 = vmul.f32 %v640, 0.03125
        %v653 = vmul.f32 %v649, 0.03125
        %v654 = vsub.f32 %v543, %v650
        %v655 = vsub.f32 %v545, %v651
        %v656 = vsub.f32 %v596, %v652
        %v657 = vsub.f32 %v598, %v653
        %v658 = vsub.f32 %v547, %v650
        %v659 = vsub.f32 %v549, %v651
        %v660 = vsub.f32 %v600, %v652
        %v661 = vsub.f32 %v602, %v653
        %v662 = vsub.f32 %v553, %v650
        %v663 = vsub.f32 %v555, %v651
        %v664 = vsub.f32 %v606, %v652
        %v665 = vsub.f32 %v608, %v653
        %v666 = vsub.f32 %v557, %v650
        %v667 = vsub.f32 %v559, %v651
        %v668 = vsub.f32 %v610, %v652
        %v669 = vsub.f32 %v612, %v653
        %v670 = vmul.f32 %v654, %v654
        %v671 = vmul.f32 %v655, %v655
        %v672 = vmul.f32 %v656, %v656
        %v673 = vmul.f32 %v657, %v657
        %v674 = vmul.f32 %v658, %v658
        %v675 = vmul.f32 %v659, %v659
        %v676 = vmul.f32 %v660, %v660
        %v677 = vmul.f32 %v661, %v661
        %v678 = vmul.f32 %v662, %v662
        %v679 = vmul.f32 %v663, %v663
        %v680 = vmul.f32 %v664, %v664
        %v681 = vmul.f32 %v665, %v665
        %v682 = vmul.f32 %v666, %v666
        %v683 = vmul.f32 %v667, %v667
        %v684 = vmul.f32 %v668, %v668
        %v685 = vmul.f32 %v669, %v669
        %v686 = vadd.f32 %v670, %v674
        %v687 = vadd.f32 %v686, %v678
        %v688 = vadd.f32 %v687, %v682
        %v689 = vrot.slane %v688, 4
        %v690 = vadd.f32 %v688, %v689
        %v691 = vrot.slane %v690, 2
        %v692 = vadd.f32 %v690, %v691
        %v693 = vrot.slane %v692, 1
        %v694 = vadd.f32 %v692, %v693
        %v695 = vadd.f32 %v671, %v675
        %v696 = vadd.f32 %v695, %v679
        %v697 = vadd.f32 %v696, %v683
        %v698 = vrot.slane %v697, 4
        %v699 = vadd.f32 %v697, %v698
        %v700 = vrot.slane %v699, 2
        %v701 = vadd.f32 %v699, %v700
        %v702 = vrot.slane %v701, 1
        %v703 = vadd.f32 %v701, %v702
        %v704 = vadd.f32 %v672, %v676
        %v705 = vadd.f32 %v704, %v680
        %v706 = vadd.f32 %v705, %v684
        %v707 = vrot.slane %v706, 4
        %v708 = vadd.f32 %v706, %v707
        %v709 = vrot.slane %v708, 2
        %v710 = vadd.f32 %v708, %v709
        %v711 = vrot.slane %v710, 1
        %v712 = vadd.f32 %v710, %v711
        %v713 = vadd.f32 %v673, %v677
        %v714 = vadd.f32 %v713, %v681
        %v715 = vadd.f32 %v714, %v685
        %v716 = vrot.slane %v715, 4
        %v717 = vadd.f32 %v715, %v716
        %v718 = vrot.slane %v717, 2
        %v719 = vadd.f32 %v717, %v718
        %v720 = vrot.slane %v719, 1
        %v721 = vadd.f32 %v719, %v720
        %v722 = vmul.f32 %v694, 0.03125
        %v723 = vmul.f32 %v703, 0.03125
        %v724 = vmul.f32 %v712, 0.03125
        %v725 = vmul.f32 %v721, 0.03125
        %v726 = vld [vmem:[%s340] sm:$0xf]
        %v727 = vadd.f32 %v722, 1e-05
        %v728 = vadd.f32 %v723, 1e-05
        %v729 = vadd.f32 %v724, 1e-05
        %v730 = vadd.f32 %v725, 1e-05
        %v731 = vrsqrt.pop %v727
        %v732 = vrsqrt.pop %v728
        %v733 = vrsqrt.pop %v729
        %v734 = vrsqrt.pop %v730
        %v739 = vcombine.low %v731, %v732
        %v740 = vcombine.low %v733, %v734
        %v742 = vunpack.c.l.s4 1966171168
        %v743 = vunpack.c.0.s8 %v742
        %v744 = vlaneseq
        %v745 = vshrl.u32 %v744, 7
        %v746 = vsub.s32 %v743, %v745
        %v747 = vrot.slane %v739, %v746
        %v749 = vunpack.c.l.s4 1966171168
        %v750 = vunpack.c.0.s8 %v749
        %v751 = vlaneseq
        %v752 = vshrl.u32 %v751, 7
        %v753 = vsub.s32 %v750, %v752
        %v754 = vrot.slane %v740, %v753
        %v755 = vcombine.low %v747, %v754
        %v757 = vunpack.c.l.s4 1966171168
        %v758 = vunpack.c.0.s8 %v757
        %v759 = vlaneseq
        %v760 = vshrl.u32 %v759, 7
        %v761 = vsub.s32 %v758, %v760
        %v762 = vrot.slane %v755, %v761
        %v764 = vmul.f32 %v726, %v762
        %v766 = vlaneseq
        %v767 = vshrl.u32 %v766, 7
        %v768 = vsub.s32 0, %v767
        %v769 = vrot.slane %v764, %v768
        %v770 = vlaneseq
        %v771 = vshrl.u32 %v770, 7
        %v772 = vsub.s32 1, %v771
        %v773 = vrot.slane %v764, %v772
        %v774 = vlaneseq
        %v775 = vshrl.u32 %v774, 7
        %v776 = vsub.s32 2, %v775
        %v777 = vrot.slane %v764, %v776
        %v778 = vlaneseq
        %v779 = vshrl.u32 %v778, 7
        %v780 = vsub.s32 3, %v779
        %v781 = vrot.slane %v764, %v780
        %v786 = vmul.f32 %v654, %v769
        %v787 = vmul.f32 %v655, %v773
        %v788 = vmul.f32 %v656, %v777
        %v789 = vmul.f32 %v657, %v781
        %v790 = vmul.f32 %v658, %v769
        %v791 = vmul.f32 %v659, %v773
        %v792 = vmul.f32 %v660, %v777
        %v793 = vmul.f32 %v661, %v781
        %v794 = vmul.f32 %v662, %v769
        %v795 = vmul.f32 %v663, %v773
        %v796 = vmul.f32 %v664, %v777
        %v797 = vmul.f32 %v665, %v781
        %v798 = vmul.f32 %v666, %v769
        %v799 = vmul.f32 %v667, %v773
        %v800 = vmul.f32 %v668, %v777
        %v801 = vmul.f32 %v669, %v781
        %v802 = vld [vmem:[%s394] sm:$0xf]
        %v804 = vlaneseq
        %v805 = vshrl.u32 %v804, 7
        %v806 = vsub.s32 0, %v805
        %v807 = vrot.slane %v802, %v806
        %v808 = vlaneseq
        %v809 = vshrl.u32 %v808, 7
        %v810 = vsub.s32 1, %v809
        %v811 = vrot.slane %v802, %v810
        %v812 = vlaneseq
        %v813 = vshrl.u32 %v812, 7
        %v814 = vsub.s32 2, %v813
        %v815 = vrot.slane %v802, %v814
        %v816 = vlaneseq
        %v817 = vshrl.u32 %v816, 7
        %v818 = vsub.s32 3, %v817
        %v819 = vrot.slane %v802, %v818
        %v824 = vadd.f32 %v786, %v807
        %v825 = vadd.f32 %v787, %v811
        %v826 = vadd.f32 %v788, %v815
        %v827 = vadd.f32 %v789, %v819
        %v828 = vadd.f32 %v790, %v807
        %v829 = vadd.f32 %v791, %v811
        %v830 = vadd.f32 %v792, %v815
        %v831 = vadd.f32 %v793, %v819
        %v832 = vadd.f32 %v794, %v807
        %v833 = vadd.f32 %v795, %v811
        %v834 = vadd.f32 %v796, %v815
        %v835 = vadd.f32 %v797, %v819
        %v836 = vadd.f32 %v798, %v807
        %v837 = vadd.f32 %v799, %v811
        %v838 = vadd.f32 %v800, %v815
        %v839 = vadd.f32 %v801, %v819
        %v840 = vmax.f32 %v824, 0.0
        %v841 = vmax.f32 %v825, 0.0
        %v842 = vmax.f32 %v826, 0.0
        %v843 = vmax.f32 %v827, 0.0
        %v844 = vmax.f32 %v828, 0.0
        %v845 = vmax.f32 %v829, 0.0
        %v846 = vmax.f32 %v830, 0.0
        %v847 = vmax.f32 %v831, 0.0
        %v848 = vmax.f32 %v832, 0.0
        %v849 = vmax.f32 %v833, 0.0
        %v850 = vmax.f32 %v834, 0.0
        %v851 = vmax.f32 %v835, 0.0
        %v852 = vmax.f32 %v836, 0.0
        %v853 = vmax.f32 %v837, 0.0
        %v854 = vmax.f32 %v838, 0.0
        %v855 = vmax.f32 %v839, 0.0
        %v856 = vld [vmem:[#allocation10] sm:$0xff]
        %v857 = vld [vmem:[#allocation10 + $0x8] sm:$0xff]
        %v858 = vld [vmem:[#allocation10 + $0x10] sm:$0xff]
        %v859 = vld [vmem:[#allocation10 + $0x18] sm:$0xff]
        %v860 = vpack.c.bf16 %v844, %v840
        %v861 = vpack.c.bf16 %v845, %v841
        %v862 = vpack.c.bf16 %v846, %v842
        %v863 = vpack.c.bf16 %v847, %v843
        %v864 = vpack.c.bf16 %v852, %v848
        %v865 = vpack.c.bf16 %v853, %v849
        %v866 = vpack.c.bf16 %v854, %v850
        %v867 = vpack.c.bf16 %v855, %v851
        %v868 = vld [vmem:[%s349] sm:$0xff]
        %v869 = vld [vmem:[%s349 + $0x8] sm:$0xff]
        %v870 = vld [vmem:[%s349 + $0x10] sm:$0xff]
        %v871 = vld [vmem:[%s349 + $0x18] sm:$0xff]
        %v872 = vld [vmem:[%s349 + $0x20] sm:$0xff]
        %v873 = vld [vmem:[%s349 + $0x28] sm:$0xff]
        %v874 = vld [vmem:[%s349 + $0x30] sm:$0xff]
        %v875 = vld [vmem:[%s349 + $0x38] sm:$0xff]
        %v876 = vld [vmem:[%s349 + $0x40] sm:$0xff]
        %v877 = vld [vmem:[%s349 + $0x48] sm:$0xff]
        %v878 = vld [vmem:[%s349 + $0x50] sm:$0xff]
        %v879 = vld [vmem:[%s349 + $0x58] sm:$0xff]
        %v880 = vld [vmem:[%s349 + $0x60] sm:$0xff]
        %v881 = vld [vmem:[%s349 + $0x68] sm:$0xff]
        %v882 = vld [vmem:[%s349 + $0x70] sm:$0xff]
        %v883 = vld [vmem:[%s349 + $0x78] sm:$0xff]
        %v884 = vld [vmem:[%s349 + $0x80] sm:$0xff]
        %v885 = vld [vmem:[%s349 + $0x88] sm:$0xff]
        %v886 = vld [vmem:[%s349 + $0x90] sm:$0xff]
        %v887 = vld [vmem:[%s349 + $0x98] sm:$0xff]
        %v888 = vld [vmem:[%s349 + $0xa0] sm:$0xff]
        %v889 = vld [vmem:[%s349 + $0xa8] sm:$0xff]
        %v890 = vld [vmem:[%s349 + $0xb0] sm:$0xff]
        %v891 = vld [vmem:[%s349 + $0xb8] sm:$0xff]
        %v892 = vld [vmem:[%s349 + $0xc0] sm:$0xff]
        %v893 = vld [vmem:[%s349 + $0xc8] sm:$0xff]
        %v894 = vld [vmem:[%s349 + $0xd0] sm:$0xff]
        %v895 = vld [vmem:[%s349 + $0xd8] sm:$0xff]
        %v896 = vld [vmem:[%s349 + $0xe0] sm:$0xff]
        %v897 = vld [vmem:[%s349 + $0xe8] sm:$0xff]
        %v898 = vld [vmem:[%s349 + $0xf0] sm:$0xff]
        %v899 = vld [vmem:[%s349 + $0xf8] sm:$0xff]
        %v900 = vld [vmem:[%s349 + $0x100] sm:$0xff]
        %v901 = vld [vmem:[%s349 + $0x108] sm:$0xff]
        %v902 = vld [vmem:[%s349 + $0x110] sm:$0xff]
        %v903 = vld [vmem:[%s349 + $0x118] sm:$0xff]
        %v904 = vld [vmem:[%s349 + $0x120] sm:$0xff]
        %v905 = vld [vmem:[%s349 + $0x128] sm:$0xff]
        %v906 = vld [vmem:[%s349 + $0x130] sm:$0xff]
        %v907 = vld [vmem:[%s349 + $0x138] sm:$0xff]
        %v908 = vld [vmem:[%s349 + $0x140] sm:$0xff]
        %v909 = vld [vmem:[%s349 + $0x148] sm:$0xff]
        %v910 = vld [vmem:[%s349 + $0x150] sm:$0xff]
        %v911 = vld [vmem:[%s349 + $0x158] sm:$0xff]
        %v912 = vld [vmem:[%s349 + $0x160] sm:$0xff]
        %v913 = vld [vmem:[%s349 + $0x168] sm:$0xff]
        %v914 = vld [vmem:[%s349 + $0x170] sm:$0xff]
        %v915 = vld [vmem:[%s349 + $0x178] sm:$0xff]
        %v916 = vld [vmem:[%s349 + $0x180] sm:$0xff]
        %v917 = vld [vmem:[%s349 + $0x188] sm:$0xff]
        %v918 = vld [vmem:[%s349 + $0x190] sm:$0xff]
        %v919 = vld [vmem:[%s349 + $0x198] sm:$0xff]
        %v920 = vld [vmem:[%s349 + $0x1a0] sm:$0xff]
        %v921 = vld [vmem:[%s349 + $0x1a8] sm:$0xff]
        %v922 = vld [vmem:[%s349 + $0x1b0] sm:$0xff]
        %v923 = vld [vmem:[%s349 + $0x1b8] sm:$0xff]
        %v924 = vld [vmem:[%s349 + $0x1c0] sm:$0xff]
        %v925 = vld [vmem:[%s349 + $0x1c8] sm:$0xff]
        %v926 = vld [vmem:[%s349 + $0x1d0] sm:$0xff]
        %v927 = vld [vmem:[%s349 + $0x1d8] sm:$0xff]
        %v928 = vld [vmem:[%s349 + $0x1e0] sm:$0xff]
        %v929 = vld [vmem:[%s349 + $0x1e8] sm:$0xff]
        %v930 = vld [vmem:[%s349 + $0x1f0] sm:$0xff]
        %v931 = vld [vmem:[%s349 + $0x1f8] sm:$0xff]
        %v932 = vpack.c.bf16 %v869, %v868
        %v933 = vpack.c.bf16 %v871, %v870
        %v934 = vpack.c.bf16 %v873, %v872
        %v935 = vpack.c.bf16 %v875, %v874
        %v936 = vpack.c.bf16 %v877, %v876
        %v937 = vpack.c.bf16 %v879, %v878
        %v938 = vpack.c.bf16 %v881, %v880
        %v939 = vpack.c.bf16 %v883, %v882
        %v940 = vpack.c.bf16 %v885, %v884
        %v941 = vpack.c.bf16 %v887, %v886
        %v942 = vpack.c.bf16 %v889, %v888
        %v943 = vpack.c.bf16 %v891, %v890
        %v944 = vpack.c.bf16 %v893, %v892
        %v945 = vpack.c.bf16 %v895, %v894
        %v946 = vpack.c.bf16 %v897, %v896
        %v947 = vpack.c.bf16 %v899, %v898
        %v948 = vpack.c.bf16 %v901, %v900
        %v949 = vpack.c.bf16 %v903, %v902
        %v950 = vpack.c.bf16 %v905, %v904
        %v951 = vpack.c.bf16 %v907, %v906
        %v952 = vpack.c.bf16 %v909, %v908
        %v953 = vpack.c.bf16 %v911, %v910
        %v954 = vpack.c.bf16 %v913, %v912
        %v955 = vpack.c.bf16 %v915, %v914
        %v956 = vpack.c.bf16 %v917, %v916
        %v957 = vpack.c.bf16 %v919, %v918
        %v958 = vpack.c.bf16 %v921, %v920
        %v959 = vpack.c.bf16 %v923, %v922
        %v960 = vpack.c.bf16 %v925, %v924
        %v961 = vpack.c.bf16 %v927, %v926
        %v962 = vpack.c.bf16 %v929, %v928
        %v963 = vpack.c.bf16 %v931, %v930
        %964 = vmatprep.subr.bf16.mxu0 0
        %965 = vmatpush1.bf16.msra.mxu0 %v932
        %966 = vmatprep.subr.bf16.mxu0 0
        %967 = vmatpush1.bf16.msra.mxu0 %v933
        %968 = vmatprep.subr.bf16.mxu0 0
        %969 = vmatpush1.bf16.msra.mxu0 %v934
        %970 = vmatprep.subr.bf16.mxu0 0
        %971 = vmatpush1.bf16.msra.mxu0 %v935
        %972 = vmatprep.subr.bf16.mxu0 0
        %973 = vmatpush1.bf16.msra.mxu0 %v936
        %974 = vmatprep.subr.bf16.mxu0 0
        %975 = vmatpush1.bf16.msra.mxu0 %v937
        %976 = vmatprep.subr.bf16.mxu0 0
        %977 = vmatpush1.bf16.msra.mxu0 %v938
        %978 = vmatprep.subr.bf16.mxu0 0
        %979 = vmatpush1.bf16.msra.mxu0 %v939
        %980 = vmatprep.subr.bf16.mxu0 0
        %981 = vmatpush1.bf16.msra.mxu0 %v940
        %982 = vmatprep.subr.bf16.mxu0 0
        %983 = vmatpush1.bf16.msra.mxu0 %v941
        %984 = vmatprep.subr.bf16.mxu0 0
        %985 = vmatpush1.bf16.msra.mxu0 %v942
        %986 = vmatprep.subr.bf16.mxu0 0
        %987 = vmatpush1.bf16.msra.mxu0 %v943
        %988 = vmatprep.subr.bf16.mxu0 0
        %989 = vmatpush1.bf16.msra.mxu0 %v944
        %990 = vmatprep.subr.bf16.mxu0 0
        %991 = vmatpush1.bf16.msra.mxu0 %v945
        %992 = vmatprep.subr.bf16.mxu0 0
        %993 = vmatpush1.bf16.msra.mxu0 %v946
        %994 = vmatprep.subr.bf16.mxu0 0
        %995 = vmatpush1.bf16.msra.mxu0 %v947
        %996 = vmatprep.mubr.bf16.mxu0 %v861
        %997 = vmatmul.mubr.bf16.gmra.mrb[0].mxu0 %v860
        %v998 = vpop.f32.mrb[0].mxu0
        %v999 = vadd.f32 0.0, %v998
        %v1000 = vpop.f32.mrb[0].mxu0
        %v1001 = vpop.f32.mrb[0].mxu0
        %v1002 = vadd.f32 0.0, %v1001
        %v1003 = vpop.f32.mrb[0].mxu0
        %1004 = vmatprep.mubr.bf16.mxu0 %v865
        %1005 = vmatmul.mubr.bf16.gmra.mrb[0].mxu0 %v864
        %v1006 = vpop.f32.mrb[0].mxu0
        %v1007 = vadd.f32 0.0, %v1006
        %v1008 = vpop.f32.mrb[0].mxu0
        %v1009 = vpop.f32.mrb[0].mxu0
        %v1010 = vadd.f32 0.0, %v1009
        %v1011 = vpop.f32.mrb[0].mxu0
        %1012 = vdwg.mxu0
        %1013 = vmatprep.subr.bf16.mxu0 0
        %1014 = vmatpush1.bf16.msra.mxu0 %v948
        %1015 = vmatprep.subr.bf16.mxu0 0
        %1016 = vmatpush1.bf16.msra.mxu0 %v949
        %1017 = vmatprep.subr.bf16.mxu0 0
        %1018 = vmatpush1.bf16.msra.mxu0 %v950
        %1019 = vmatprep.subr.bf16.mxu0 0
        %1020 = vmatpush1.bf16.msra.mxu0 %v951
        %1021 = vmatprep.subr.bf16.mxu0 0
        %1022 = vmatpush1.bf16.msra.mxu0 %v952
        %1023 = vmatprep.subr.bf16.mxu0 0
        %1024 = vmatpush1.bf16.msra.mxu0 %v953
        %1025 = vmatprep.subr.bf16.mxu0 0
        %1026 = vmatpush1.bf16.msra.mxu0 %v954
        %1027 = vmatprep.subr.bf16.mxu0 0
        %1028 = vmatpush1.bf16.msra.mxu0 %v955
        %1029 = vmatprep.subr.bf16.mxu0 0
        %1030 = vmatpush1.bf16.msra.mxu0 %v956
        %1031 = vmatprep.subr.bf16.mxu0 0
        %1032 = vmatpush1.bf16.msra.mxu0 %v957
        %1033 = vmatprep.subr.bf16.mxu0 0
        %1034 = vmatpush1.bf16.msra.mxu0 %v958
        %1035 = vmatprep.subr.bf16.mxu0 0
        %1036 = vmatpush1.bf16.msra.mxu0 %v959
        %1037 = vmatprep.subr.bf16.mxu0 0
        %1038 = vmatpush1.bf16.msra.mxu0 %v960
        %1039 = vmatprep.subr.bf16.mxu0 0
        %1040 = vmatpush1.bf16.msra.mxu0 %v961
        %1041 = vmatprep.subr.bf16.mxu0 0
        %1042 = vmatpush1.bf16.msra.mxu0 %v962
        %1043 = vmatprep.subr.bf16.mxu0 0
        %1044 = vmatpush1.bf16.msra.mxu0 %v963
        %1045 = vmatprep.mubr.bf16.mxu0 %v863
        %1046 = vmatmul.mubr.bf16.gmra.mrb[0].mxu0 %v862
        %v1047 = vpop.f32.mrb[0].mxu0
        %v1048 = vadd.f32 %v999, %v1047
        %v1049 = vpop.f32.mrb[0].mxu0
        %v1050 = vpop.f32.mrb[0].mxu0
        %v1051 = vadd.f32 %v1002, %v1050
        %v1052 = vpop.f32.mrb[0].mxu0
        %1053 = vmatprep.mubr.bf16.mxu0 %v867
        %1054 = vmatmul.mubr.bf16.gmra.mrb[0].mxu0 %v866
        %v1055 = vpop.f32.mrb[0].mxu0
        %v1056 = vadd.f32 %v1007, %v1055
        %v1057 = vpop.f32.mrb[0].mxu0
        %v1058 = vpop.f32.mrb[0].mxu0
        %v1059 = vadd.f32 %v1010, %v1058
        %v1060 = vpop.f32.mrb[0].mxu0
        %1061 = vdwg.mxu0
        %v1062 = vadd.f32 %v856, %v1048
        %v1063 = vadd.f32 %v857, %v1051
        %v1064 = vadd.f32 %v858, %v1056
        %v1065 = vadd.f32 %v859, %v1059
        %1066 = vst [vmem:[#allocation10] sm:$0xff] %v1062
        %1067 = vst [vmem:[#allocation10 + $0x8] sm:$0xff] %v1063
        %1068 = vst [vmem:[#allocation10 + $0x10] sm:$0xff] %v1064
        %1069 = vst [vmem:[#allocation10 + $0x18] sm:$0xff] %v1065
        %p1070 = scmp.eq.s32.totalorder %s26, 1
        // Predicated region
        $region69: #{tpu_custom_call.1} parent=47 // pred_check
          %p1071 = pneg %p1070
        $region70: #{tpu_custom_call.1} parent=47 // pred_check_branch
          %1073 = sbr.rel (%p1071) target = $region72
        $region71: #{tpu_custom_call.1} parent=47 // pred_region
          %v1074 = vld [vmem:[#allocation10] sm:$0xff]
          %v1075 = vld [vmem:[#allocation10 + $0x8] sm:$0xff]
          %v1076 = vld [vmem:[#allocation10 + $0x10] sm:$0xff]
          %v1077 = vld [vmem:[#allocation10 + $0x18] sm:$0xff]
          %v1078 = vadd.f32 %v1074, %v1075
          %v1079 = vadd.f32 %v1078, %v1076
          %v1080 = vadd.f32 %v1079, %v1077
          %v1081 = vrot.slane %v1080, 4
          %v1082 = vadd.f32 %v1080, %v1081
          %v1083 = vrot.slane %v1082, 2
          %v1084 = vadd.f32 %v1082, %v1083
          %v1085 = vrot.slane %v1084, 1
          %v1086 = vadd.f32 %v1084, %v1085
          %v1087 = vmul.f32 %v1086, 0.03125
          %v1088 = vsub.f32 %v1074, %v1087
          %v1089 = vsub.f32 %v1075, %v1087
          %v1090 = vsub.f32 %v1076, %v1087
          %v1091 = vsub.f32 %v1077, %v1087
          %v1092 = vmul.f32 %v1088, %v1088
          %v1093 = vmul.f32 %v1089, %v1089
          %v1094 = vmul.f32 %v1090, %v1090
          %v1095 = vmul.f32 %v1091, %v1091
          %v1096 = vadd.f32 %v1092, %v1093
          %v1097 = vadd.f32 %v1096, %v1094
          %v1098 = vadd.f32 %v1097, %v1095
          %v1099 = vrot.slane %v1098, 4
          %v1100 = vadd.f32 %v1098, %v1099
          %v1101 = vrot.slane %v1100, 2
          %v1102 = vadd.f32 %v1100, %v1101
          %v1103 = vrot.slane %v1102, 1
          %v1104 = vadd.f32 %v1102, %v1103
          %v1105 = vmul.f32 %v1104, 0.03125
          %v1106 = vld [vmem:[%s5] sm:$0x1]
          %v1107 = vadd.f32 %v1105, 1e-05
          %v1108 = vrsqrt.pop %v1107
          %v1109 = vmul.f32 %v1106, %v1108
          %v1111 = vlaneseq
          %v1112 = vshrl.u32 %v1111, 7
          %v1113 = vsub.s32 0, %v1112
          %v1114 = vrot.slane %v1109, %v1113
          %v1116 = vmul.f32 %v1088, %v1114
          %v1117 = vmul.f32 %v1089, %v1114
          %v1118 = vmul.f32 %v1090, %v1114
          %v1119 = vmul.f32 %v1091, %v1114
          %v1120 = vld [vmem:[%s6] sm:$0x1]
          %v1122 = vlaneseq
          %v1123 = vshrl.u32 %v1122, 7
          %v1124 = vsub.s32 0, %v1123
          %v1125 = vrot.slane %v1120, %v1124
          %v1127 = vadd.f32 %v1116, %v1125
          %v1128 = vadd.f32 %v1117, %v1125
          %v1129 = vadd.f32 %v1118, %v1125
          %v1130 = vadd.f32 %v1119, %v1125
          %1131 = vst [vmem:[#allocation10] sm:$0xff] %v1127
          %1132 = vst [vmem:[#allocation10 + $0x8] sm:$0xff] %v1128
          %1133 = vst [vmem:[#allocation10 + $0x10] sm:$0xff] %v1129
          %1134 = vst [vmem:[#allocation10 + $0x18] sm:$0xff] %v1130
        $region72: #{tpu_custom_call.1} parent=47 // pred_fallthru
          _
        // Predicated region
        $region73: #{tpu_custom_call.1} parent=47 // pred_check
          %p1135 = pneg %p206
        $region74: #{tpu_custom_call.1} parent=47 // pred_check_branch
          %1137 = sbr.rel (%p1135) target = $region76
        $region75: #{tpu_custom_call.1} parent=47 // pred_region
          %s1139 = ssub.s32 512, 512
          %1140 = vsyncadd [#allocation4], %s1139
          %s1141 = sshll.u32 [#allocation10], 4
          %s1142 = int_to_ptr.vmem [resolvable:$true] %s1141
          %1147 = dma.vmem_to_hbm [thread:$0]  %s1142, 512, %s7, [#allocation4], 128, 128, 8
        $region76: #{tpu_custom_call.1} parent=47 // pred_fallthru
          _
        // Predicated region
        $region77: #{tpu_custom_call.1} parent=47 // pred_check
          %p1148 = pneg %p206
        $region78: #{tpu_custom_call.1} parent=47 // pred_check_branch
          %1150 = sbr.rel (%p1148) target = $region80
        $region79: #{tpu_custom_call.1} parent=47 // pred_region
          %1151 = dma.done [#allocation4], 512
        $region80: #{tpu_custom_call.1} parent=47 // pred_fallthru
          _
      $region48: #{tpu_custom_call.1} parent=5 // pred_fallthru
        _
      %p1152 = scmp.le.s32.totalorder 2, %s21
      // Predicated region
      $region81: #{tpu_custom_call.1} parent=5 // pred_check
        %p1153 = pneg %p1152
      $region82: #{tpu_custom_call.1} parent=5 // pred_check_branch
        %1155 = sbr.rel (%p1153) target = $region84
      $region83: #{tpu_custom_call.1} parent=5 // pred_region
        %s1156 = ssub.s32 %s21, 2
      $region84: #{tpu_custom_call.1} parent=5 // pred_fallthru
        _
    $region6: #{tpu_custom_call.1} parent=1 // loop_footer
      %s25 = sadd.s32 1, %s21
    $region7: #{tpu_custom_call.1} parent=1 // loop_footer_branch
      %20 = sbr.rel target = $region3
    $region8: #{tpu_custom_call.1} parent=1 // loop_exit
      _
    %1157 = vsyncpa [#allocation3], 1
    %s1158 = scalar_lea.sflag [#allocation3], 1
    %1159 = vsyncpa %s1158, 1
    %1160 = vsyncpa [#allocation6], 1
    %s1161 = scalar_lea.sflag [#allocation6], 1
    %1162 = vsyncpa %s1161, 1
    %1163 = vsyncpa [#allocation9], 1
    %s1164 = scalar_lea.sflag [#allocation9], 1
    %1165 = vsyncpa %s1164, 1
    %1166 = vsyncpa [#allocation4], 1
    %s1167 = scalar_lea.sflag [#allocation4], 1
    %1168 = vsyncpa %s1167, 1

// kernel: tpu_custom_call.1
$region0: #{tpu_custom_call.1}
  #allocation0 [shape = 'u32[]', space=smem, size = 0x4, offset = 0x4, fixed_abs, tag = 'smem constant byte address 0x4 - core index']
  #allocation1 [shape = 'u32[144,128]{1,0:T(1,128)}', space=vmem, size = 0x12000, scoped, tag = 'internal scratch']
  %s0 = inlined_call_operand.hbm [shape: f32[32,128], index: 0, kind: input, shape index: {}]
  %s1 = inlined_call_operand.hbm [shape: f32[128,1024], index: 1, kind: input, shape index: {}]
  %s2 = inlined_call_operand.hbm [shape: f32[1,1024], index: 2, kind: input, shape index: {}]
  %s3 = inlined_call_operand.vmem [shape: f32[1,1024], index: 3, kind: input, shape index: {}]
  %s4 = inlined_call_operand.hbm [shape: f32[1024,128], index: 4, kind: input, shape index: {}]
  %s5 = inlined_call_operand.vmem [shape: f32[1,128], index: 5, kind: input, shape index: {}]
  %s6 = inlined_call_operand.vmem [shape: f32[1,128], index: 6, kind: input, shape index: {}]
  %s7 = inlined_call_operand.hbm [shape: f32[32,128], index: 7, kind: output, shape index: {}]
  %s8 = sld [smem:[#allocation0]]
  $region85: #{tpu_custom_call.1} parent=0
    _
  %s10 = ssub.s32 1, %s8
  %s11 = scalar_select 0, %s10, %s8
  $region1: #{tpu_custom_call.1} parent=0
    #allocation2 [shape = 'u8[16384]{0}', space=vmem, size = 0x4000, scoped, tag = 'input window, operand 0, single buffered']
    #allocation3 [shape = 's32[2]{0}', space=sflag, size = 0x8, scoped, tag = 'scoped memory for tpu_custom_call.1']
    #allocation4 [shape = 's32[2]{0}', space=sflag, size = 0x8, scoped, tag = 'scoped memory for tpu_custom_call.1']
    #allocation5 [shape = 'u8[524288]{0}', space=vmem, size = 0x80000, scoped, tag = 'input window, operand 1']
    #allocation6 [shape = 's32[2]{0}', space=sflag, size = 0x8, scoped, tag = 'scoped memory for tpu_custom_call.1']
    #allocation7 [shape = 'u8[4096]{0}', space=vmem, size = 0x1000, scoped, tag = 'input window, operand 2']
    #allocation8 [shape = 'u8[524288]{0}', space=vmem, size = 0x80000, scoped, tag = 'input window, operand 4']
    #allocation9 [shape = 's32[2]{0}', space=sflag, size = 0x8, scoped, tag = 'scoped memory for tpu_custom_call.1']
    #allocation10 [shape = 'u8[16384]{0}', space=vmem, size = 0x4000, scoped, tag = 'output window, operand 0, single buffered']
    %12 = vsyncpa [#allocation3], 0
    %13 = vsyncpa [#allocation6], 0
    %s14 = scalar_lea.sflag [#allocation6], 1
    %15 = vsyncpa %s14, 0
    %16 = vsyncpa [#allocation9], 0
    %s17 = scalar_lea.sflag [#allocation9], 1
    %18 = vsyncpa %s17, 0
    %19 = vsyncpa [#allocation4], 0
    loop: start=0, step=1, limit=4
    $region2: #{tpu_custom_call.1} parent=1 // loop_pre_header
      _
    $region3: #{tpu_custom_call.1} parent=1 // loop_header
      %s21 = sphi 0, %s25
      %p22 = scmp.ge.s32.totalorder %s21, 4
      %s29 = sphi 0, %s29
      %s31 = sphi 0, %s29
      %s32 = sphi 0, %s31
      %s46 = sphi 0, %s32
      %s52 = sphi 0, %s54
      %s55 = sphi 0, %s52
      %s56 = sphi 0, %s55
      %s72 = sphi 0, %s56
      %s78 = sphi 0, %s80
      %s81 = sphi 0, %s78
      %s82 = sphi 0, %s81
      %s98 = sphi 0, %s82
      %s104 = sphi 0, %s106
      %s107 = sphi 0, %s104
      %s108 = sphi 0, %s107
      %s124 = sphi 0, %s108
      %s130 = sphi 0, %s132
      %s133 = sphi 0, %s130
      %s134 = sphi 0, %s133
      %s150 = sphi 0, %s134
      %s154 = sphi 0, %s154
      %s156 = sphi 0, %s154
      %s157 = sphi 0, %s156
      %s171 = sphi 0, %s157
      %s175 = sphi 0, %s175
      %s177 = sphi 0, %s175
      %s178 = sphi 0, %s177
      %s192 = sphi 0, %s178
      %s196 = sphi 0, %s196
      %s198 = sphi 0, %s196
      %s199 = sphi 0, %s198
      %s213 = sphi 0, %s199
    $region4: #{tpu_custom_call.1} parent=1 // loop_header_branch
      %24 = sbr.rel (%p22) target = $region8
    $region5: #{tpu_custom_call.1} parent=1 // loop_body
      %s26 = ssub.s32 %s21, 1
      %s27 = ssub.s32 %s21, 2
      %s28 = sadd.s32 %s21, 1
      %s30 = sadd.s32 %s29, 1
      %p33 = scmp.eq.s32.totalorder %s21, 1
      %p34 = scmp.ne.s32.totalorder %s29, %s31
      %p35 = scmp.eq.s32.totalorder %s21, 0
      %p36 = por %p34, %p35
      %p37 = scmp.ne.s32.totalorder %s29, %s31
      %p38 = scmp.eq.s32.totalorder %s26, 1
      %p39 = por %p37, %p38
      %p40 = scmp.ne.s32.totalorder %s31, %s32
      %p41 = scmp.eq.s32.totalorder %s26, 0
      %p42 = por %p40, %p41
      %p43 = scmp.ne.s32.totalorder %s31, %s32
      %p44 = scmp.eq.s32.totalorder %s27, 1
      %p45 = por %p43, %p44
      %p47 = scmp.ne.s32.totalorder %s32, %s46
      %p48 = scmp.eq.s32.totalorder %s27, 0
      %p49 = por %p47, %p48
      %s50 = ssub.s32 %s21, %s28
      %p51 = scmp.eq.s32.totalorder %s50, 0
      %s53 = sadd.s32 %s52, 1
      %s54 = scalar_select %p51, %s52, %s53
      %p57 = pneg %p51
      %p58 = scmp.eq.s32.totalorder %s21, 1
      %p59 = por %p57, %p58
      %p60 = scmp.ne.s32.totalorder %s52, %s55
      %p61 = scmp.eq.s32.totalorder %s21, 0
      %p62 = por %p60, %p61
      %p63 = scmp.ne.s32.totalorder %s52, %s55
      %p64 = scmp.eq.s32.totalorder %s26, 1
      %p65 = por %p63, %p64
      %p66 = scmp.ne.s32.totalorder %s55, %s56
      %p67 = scmp.eq.s32.totalorder %s26, 0
      %p68 = por %p66, %p67
      %p69 = scmp.ne.s32.totalorder %s55, %s56
      %p70 = scmp.eq.s32.totalorder %s27, 1
      %p71 = por %p69, %p70
      %p73 = scmp.ne.s32.totalorder %s56, %s72
      %p74 = scmp.eq.s32.totalorder %s27, 0
      %p75 = por %p73, %p74
      %s76 = ssub.s32 %s21, %s28
      %p77 = scmp.eq.s32.totalorder %s76, 0
      %s79 = sadd.s32 %s78, 1
      %s80 = scalar_select %p77, %s78, %s79
      %p83 = pneg %p77
      %p84 = scmp.eq.s32.totalorder %s21, 1
      %p85 = por %p83, %p84
      %p86 = scmp.ne.s32.totalorder %s78, %s81
      %p87 = scmp.eq.s32.totalorder %s21, 0
      %p88 = por %p86, %p87
      %p89 = scmp.ne.s32.totalorder %s78, %s81
      %p90 = scmp.eq.s32.totalorder %s26, 1
      %p91 = por %p89, %p90
      %p92 = scmp.ne.s32.totalorder %s81, %s82
      %p93 = scmp.eq.s32.totalorder %s26, 0
      %p94 = por %p92, %p93
      %p95 = scmp.ne.s32.totalorder %s81, %s82
      %p96 = scmp.eq.s32.totalorder %s27, 1
      %p97 = por %p95, %p96
      %p99 = scmp.ne.s32.totalorder %s82, %s98
      %p100 = scmp.eq.s32.totalorder %s27, 0
      %p101 = por %p99, %p100
      %s102 = ssub.s32 %s21, %s28
      %p103 = scmp.eq.s32.totalorder %s102, 0
      %s105 = sadd.s32 %s104, 1
      %s106 = scalar_select %p103, %s104, %s105
      %p109 = pneg %p103
      %p110 = scmp.eq.s32.totalorder %s21, 1
      %p111 = por %p109, %p110
      %p112 = scmp.ne.s32.totalorder %s104, %s107
      %p113 = scmp.eq.s32.totalorder %s21, 0
      %p114 = por %p112, %p113
      %p115 = scmp.ne.s32.totalorder %s104, %s107
      %p116 = scmp.eq.s32.totalorder %s26, 1
      %p117 = por %p115, %p116
      %p118 = scmp.ne.s32.totalorder %s107, %s108
      %p119 = scmp.eq.s32.totalorder %s26, 0
      %p120 = por %p118, %p119
      %p121 = scmp.ne.s32.totalorder %s107, %s108
      %p122 = scmp.eq.s32.totalorder %s27, 1
      %p123 = por %p121, %p122
      %p125 = scmp.ne.s32.totalorder %s108, %s124
      %p126 = scmp.eq.s32.totalorder %s27, 0
      %p127 = por %p125, %p126
      %s128 = ssub.s32 %s21, %s28
      %p129 = scmp.eq.s32.totalorder %s128, 0
      %s131 = sadd.s32 %s130, 1
      %s132 = scalar_select %p129, %s130, %s131
      %p135 = pneg %p129
      %p136 = scmp.eq.s32.totalorder %s21, 1
      %p137 = por %p135, %p136
      %p138 = scmp.ne.s32.totalorder %s130, %s133
      %p139 = scmp.eq.s32.totalorder %s21, 0
      %p140 = por %p138, %p139
      %p141 = scmp.ne.s32.totalorder %s130, %s133
      %p142 = scmp.eq.s32.totalorder %s26, 1
      %p143 = por %p141, %p142
      %p144 = scmp.ne.s32.totalorder %s133, %s134
      %p145 = scmp.eq.s32.totalorder %s26, 0
      %p146 = por %p144, %p145
      %p147 = scmp.ne.s32.totalorder %s133, %s134
      %p148 = scmp.eq.s32.totalorder %s27, 1
      %p149 = por %p147, %p148
      %p151 = scmp.ne.s32.totalorder %s134, %s150
      %p152 = scmp.eq.s32.totalorder %s27, 0
      %p153 = por %p151, %p152
      %s155 = sadd.s32 %s154, 1
      %p158 = scmp.eq.s32.totalorder %s21, 1
      %p159 = scmp.ne.s32.totalorder %s154, %s156
      %p160 = scmp.eq.s32.totalorder %s21, 0
      %p161 = por %p159, %p160
      %p162 = scmp.ne.s32.totalorder %s154, %s156
      %p163 = scmp.eq.s32.totalorder %s26, 1
      %p164 = por %p162, %p163
      %p165 = scmp.ne.s32.totalorder %s156, %s157
      %p166 = scmp.eq.s32.totalorder %s26, 0
      %p167 = por %p165, %p166
      %p168 = scmp.ne.s32.totalorder %s156, %s157
      %p169 = scmp.eq.s32.totalorder %s27, 1
      %p170 = por %p168, %p169
      %p172 = scmp.ne.s32.totalorder %s157, %s171
      %p173 = scmp.eq.s32.totalorder %s27, 0
      %p174 = por %p172, %p173
      %s176 = sadd.s32 %s175, 1
      %p179 = scmp.eq.s32.totalorder %s21, 1
      %p180 = scmp.ne.s32.totalorder %s175, %s177
      %p181 = scmp.eq.s32.totalorder %s21, 0
      %p182 = por %p180, %p181
      %p183 = scmp.ne.s32.totalorder %s175, %s177
      %p184 = scmp.eq.s32.totalorder %s26, 1
      %p185 = por %p183, %p184
      %p186 = scmp.ne.s32.totalorder %s177, %s178
      %p187 = scmp.eq.s32.totalorder %s26, 0
      %p188 = por %p186, %p187
      %p189 = scmp.ne.s32.totalorder %s177, %s178
      %p190 = scmp.eq.s32.totalorder %s27, 1
      %p191 = por %p189, %p190
      %p193 = scmp.ne.s32.totalorder %s178, %s192
      %p194 = scmp.eq.s32.totalorder %s27, 0
      %p195 = por %p193, %p194
      %s197 = sadd.s32 %s196, 1
      %p200 = scmp.eq.s32.totalorder %s21, 1
      %p201 = scmp.ne.s32.totalorder %s196, %s198
      %p202 = scmp.eq.s32.totalorder %s21, 0
      %p203 = por %p201, %p202
      %p204 = scmp.ne.s32.totalorder %s196, %s198
      %p205 = scmp.eq.s32.totalorder %s26, 1
      %p206 = por %p204, %p205
      %p207 = scmp.ne.s32.totalorder %s198, %s199
      %p208 = scmp.eq.s32.totalorder %s26, 0
      %p209 = por %p207, %p208
      %p210 = scmp.ne.s32.totalorder %s198, %s199
      %p211 = scmp.eq.s32.totalorder %s27, 1
      %p212 = por %p210, %p211
      %p214 = scmp.ne.s32.totalorder %s199, %s213
      %p215 = scmp.eq.s32.totalorder %s27, 0
      %p216 = por %p214, %p215
      %p217 = scmp.le.s32.totalorder 1, %s21
      %p218 = scmp.lt.s32.totalorder %s21, 3
      %p219 = pnand %p217, %p218
      %p220 = pneg %p219
      // Predicated region
      $region9: #{tpu_custom_call.1} parent=5 // pred_check
        _
      $region10: #{tpu_custom_call.1} parent=5 // pred_check_branch
        %222 = sbr.rel (%p219) target = $region12
      $region11: #{tpu_custom_call.1} parent=5 // pred_region
        %s223 = ssub.s32 %s21, 1
        // Predicated region
        $region13: #{tpu_custom_call.1} parent=11 // pred_check
          %p224 = pneg %p42
        $region14: #{tpu_custom_call.1} parent=11 // pred_check_branch
          %226 = sbr.rel (%p224) target = $region16
        $region15: #{tpu_custom_call.1} parent=11 // pred_region
          %s228 = ssub.s32 512, 512
          %229 = vsyncadd [#allocation3], %s228
          %s230 = sshll.u32 [#allocation2], 4
          %s231 = int_to_ptr.vmem [resolvable:$true] %s230
          %236 = dma.hbm_to_vmem [thread:$0]  %s0, 512, %s231, [#allocation3], 128, 128, 8
        $region16: #{tpu_custom_call.1} parent=11 // pred_fallthru
          _
        // Predicated region
        $region17: #{tpu_custom_call.1} parent=11 // pred_check
          %p237 = pneg %p167
        $region18: #{tpu_custom_call.1} parent=11 // pred_check_branch
          %239 = sbr.rel (%p237) target = $region20
        $region19: #{tpu_custom_call.1} parent=11 // pred_region
          _
        $region20: #{tpu_custom_call.1} parent=11 // pred_fallthru
          _
        // Predicated region
        $region21: #{tpu_custom_call.1} parent=11 // pred_check
          %p240 = pneg %p188
        $region22: #{tpu_custom_call.1} parent=11 // pred_check_branch
          %242 = sbr.rel (%p240) target = $region24
        $region23: #{tpu_custom_call.1} parent=11 // pred_region
          _
        $region24: #{tpu_custom_call.1} parent=11 // pred_fallthru
          _
      $region12: #{tpu_custom_call.1} parent=5 // pred_fallthru
        _
      %p243 = scmp.lt.s32.totalorder %s21, 2
      // Predicated region
      $region25: #{tpu_custom_call.1} parent=5 // pred_check
        %p244 = pneg %p243
      $region26: #{tpu_custom_call.1} parent=5 // pred_check_branch
        %246 = sbr.rel (%p244) target = $region28
      $region27: #{tpu_custom_call.1} parent=5 // pred_region
        // Predicated region
        $region29: #{tpu_custom_call.1} parent=27 // pred_check
          %p247 = pneg %p62
        $region30: #{tpu_custom_call.1} parent=27 // pred_check_branch
          %249 = sbr.rel (%p247) target = $region32
        $region31: #{tpu_custom_call.1} parent=27 // pred_region
          %s250 = sand.u32 %s21, 1
          %s251 = scalar_lea.sflag [#allocation6], %s250
          %s252 = sand.u32 %s52, 1
          %s253 = smul.addr %s252, 512
          %s254 = scalar_lea.vmem [#allocation5], %s253
          %s255 = smul.u32 4, %s21
          %s257 = ssub.s32 8192, 8192
          %258 = vsyncadd %s251, %s257
          %s259 = smul.addr %s255, 128
          %s260 = scalar_lea.hbm %s1, %s259
          %s261 = sshll.u32 %s254, 4
          %s262 = int_to_ptr.vmem [resolvable:$true] %s261
          %267 = dma.hbm_to_vmem [thread:$0]  %s260, 8192, %s262, %s251, 1024, 512, 32
        $region32: #{tpu_custom_call.1} parent=27 // pred_fallthru
          _
        // Predicated region
        $region33: #{tpu_custom_call.1} parent=27 // pred_check
          %p268 = pneg %p88
        $region34: #{tpu_custom_call.1} parent=27 // pred_check_branch
          %270 = sbr.rel (%p268) target = $region36
        $region35: #{tpu_custom_call.1} parent=27 // pred_region
          %s271 = sand.u32 %s21, 1
          %s272 = scalar_lea.sflag [#allocation6], %s271
          %s273 = sand.u32 %s78, 1
          %s274 = smul.addr %s273, 4
          %s275 = scalar_lea.vmem [#allocation7], %s274
          %s276 = smul.u32 4, %s21
          %s278 = ssub.s32 64, 64
          %279 = vsyncadd %s272, %s278
          %s280 = smul.addr %s276, 16
          %s281 = scalar_lea.hbm %s2, %s280
          %s283 = sshll.u32 %s275, 4
          %s284 = int_to_ptr.vmem [resolvable:$true] %s283
          %286 = dma.hbm_to_vmem [thread:$0]  %s281, 64, %s284, %s272
        $region36: #{tpu_custom_call.1} parent=27 // pred_fallthru
          _
        // Predicated region
        $region37: #{tpu_custom_call.1} parent=27 // pred_check
          %p287 = pneg %p114
        $region38: #{tpu_custom_call.1} parent=27 // pred_check_branch
          %289 = sbr.rel (%p287) target = $region40
        $region39: #{tpu_custom_call.1} parent=27 // pred_region
          %s290 = smul.u32 4, %s21
          %p291 = scmp.lt.s32.totalorder %s290, 7
          %s292 = scalar_select %p291, %s290, 7
          %s293 = scalar_lea.vmem %s3, %s292
          %s294 = smul.u32 4, %s21
        $region40: #{tpu_custom_call.1} parent=27 // pred_fallthru
          _
        // Predicated region
        $region41: #{tpu_custom_call.1} parent=27 // pred_check
          %p295 = pneg %p140
        $region42: #{tpu_custom_call.1} parent=27 // pred_check_branch
          %297 = sbr.rel (%p295) target = $region44
        $region43: #{tpu_custom_call.1} parent=27 // pred_region
          %s298 = sand.u32 %s130, 1
          %s299 = scalar_lea.sflag [#allocation9], %s298
          %s300 = sand.u32 %s130, 1
          %s301 = smul.addr %s300, 512
          %s302 = scalar_lea.vmem [#allocation8], %s301
          %s303 = smul.u32 64, %s21
          %s305 = ssub.s32 8192, 8192
          %306 = vsyncadd %s299, %s305
          %s307 = smul.addr %s303, 128
          %s308 = scalar_lea.hbm %s4, %s307
          %s309 = sshll.u32 %s302, 4
          %s310 = int_to_ptr.vmem [resolvable:$true] %s309
          %315 = dma.hbm_to_vmem [thread:$0]  %s308, 8192, %s310, %s299, 128, 128, 8
        $region44: #{tpu_custom_call.1} parent=27 // pred_fallthru
          _
      $region28: #{tpu_custom_call.1} parent=5 // pred_fallthru
        _
      %p316 = scmp.le.s32.totalorder 1, %s21
      %p317 = scmp.lt.s32.totalorder %s21, 3
      %p318 = pnand %p316, %p317
      %p319 = pneg %p318
      // Predicated region
      $region45: #{tpu_custom_call.1} parent=5 // pred_check
        _
      $region46: #{tpu_custom_call.1} parent=5 // pred_check_branch
        %321 = sbr.rel (%p318) target = $region48
      $region47: #{tpu_custom_call.1} parent=5 // pred_region
        %s322 = ssub.s32 %s21, 1
        // Predicated region
        $region49: #{tpu_custom_call.1} parent=47 // pred_check
          %p323 = pneg %p42
        $region50: #{tpu_custom_call.1} parent=47 // pred_check_branch
          %325 = sbr.rel (%p323) target = $region52
        $region51: #{tpu_custom_call.1} parent=47 // pred_region
          %326 = dma.done [#allocation3], 512
        $region52: #{tpu_custom_call.1} parent=47 // pred_fallthru
          _
        %s327 = sand.u32 %s26, 1
        %s328 = scalar_lea.sflag [#allocation6], %s327
        %s329 = sand.u32 %s55, 1
        %s330 = smul.addr %s329, 512
        %s331 = scalar_lea.vmem [#allocation5], %s330
        // Predicated region
        $region53: #{tpu_custom_call.1} parent=47 // pred_check
          %p332 = pneg %p68
        $region54: #{tpu_custom_call.1} parent=47 // pred_check_branch
          %334 = sbr.rel (%p332) target = $region56
        $region55: #{tpu_custom_call.1} parent=47 // pred_region
          %335 = dma.done %s328, 8192
        $region56: #{tpu_custom_call.1} parent=47 // pred_fallthru
          _
        %s336 = sand.u32 %s26, 1
        %s337 = scalar_lea.sflag [#allocation6], %s336
        %s338 = sand.u32 %s81, 1
        %s339 = smul.addr %s338, 4
        %s340 = scalar_lea.vmem [#allocation7], %s339
        // Predicated region
        $region57: #{tpu_custom_call.1} parent=47 // pred_check
          %p341 = pneg %p94
        $region58: #{tpu_custom_call.1} parent=47 // pred_check_branch
          %343 = sbr.rel (%p341) target = $region60
        $region59: #{tpu_custom_call.1} parent=47 // pred_region
          %344 = dma.done %s337, 64
        $region60: #{tpu_custom_call.1} parent=47 // pred_fallthru
          _
        %s345 = sand.u32 %s133, 1
        %s346 = scalar_lea.sflag [#allocation9], %s345
        %s347 = sand.u32 %s133, 1
        %s348 = smul.addr %s347, 512
        %s349 = scalar_lea.vmem [#allocation8], %s348
        // Predicated region
        $region61: #{tpu_custom_call.1} parent=47 // pred_check
          %p350 = pneg %p146
        $region62: #{tpu_custom_call.1} parent=47 // pred_check_branch
          %352 = sbr.rel (%p350) target = $region64
        $region63: #{tpu_custom_call.1} parent=47 // pred_region
          %353 = dma.done %s346, 8192
        $region64: #{tpu_custom_call.1} parent=47 // pred_fallthru
          _
        %p354 = pneg %p42
        %p355 = pneg %p39
        %s356 = sand.u32 %s26, 1
        %s357 = scalar_lea.sflag [#allocation6], %s356
        %s358 = sand.u32 %s55, 1
        %s359 = smul.addr %s358, 512
        %s360 = scalar_lea.vmem [#allocation5], %s359
        %p361 = pneg %p68
        %p362 = pneg %p65
        %s363 = sand.u32 %s26, 1
        %s364 = scalar_lea.sflag [#allocation6], %s363
        %s365 = sand.u32 %s81, 1
        %s366 = smul.addr %s365, 4
        %s367 = scalar_lea.vmem [#allocation7], %s366
        %p368 = pneg %p94
        %p369 = pneg %p91
        %s370 = smul.u32 4, %s26
        %p371 = scmp.lt.s32.totalorder %s370, 7
        %s372 = scalar_select %p371, %s370, 7
        %s373 = scalar_lea.vmem %s3, %s372
        %p374 = pneg %p120
        %p375 = pneg %p117
        %s376 = sand.u32 %s133, 1
        %s377 = scalar_lea.sflag [#allocation9], %s376
        %s378 = sand.u32 %s133, 1
        %s379 = smul.addr %s378, 512
        %s380 = scalar_lea.vmem [#allocation8], %s379
        %p381 = pneg %p146
        %p382 = pneg %p143
        %p383 = pneg %p167
        %p384 = pneg %p164
        %p385 = pneg %p188
        %p386 = pneg %p185
        %p387 = pneg %p209
        %p388 = pneg %p206
        %s389 = smul.u32 4, %s26
        %s390 = smul.u32 4, %s26
        %s391 = smul.u32 4, %s26
        %p392 = scmp.lt.s32.totalorder %s391, 7
        %s393 = scalar_select %p392, %s391, 7
        %s394 = scalar_lea.vmem %s3, %s393
        %s395 = smul.u32 4, %s26
        %s396 = smul.u32 64, %s26
        %p398 = scmp.eq.s32.totalorder %s26, 0
        // Predicated region
        $region65: #{tpu_custom_call.1} parent=47 // pred_check
          %p399 = pneg %p398
        $region66: #{tpu_custom_call.1} parent=47 // pred_check_branch
          %401 = sbr.rel (%p399) target = $region68
        $region67: #{tpu_custom_call.1} parent=47 // pred_region
          %402 = vst [vmem:[#allocation10] sm:$0xff] 0.0
          %403 = vst [vmem:[#allocation10 + $0x8] sm:$0xff] 0.0
          %404 = vst [vmem:[#allocation10 + $0x10] sm:$0xff] 0.0
          %405 = vst [vmem:[#allocation10 + $0x18] sm:$0xff] 0.0
        $region68: #{tpu_custom_call.1} parent=47 // pred_fallthru
          _
        %v406 = vld [vmem:[#allocation2] sm:$0xff]
        %v407 = vld [vmem:[#allocation2 + $0x8] sm:$0xff]
        %v408 = vld [vmem:[#allocation2 + $0x10] sm:$0xff]
        %v409 = vld [vmem:[#allocation2 + $0x18] sm:$0xff]
        %v410 = vpack.c.bf16 %v407, %v406
        %v411 = vpack.c.bf16 %v409, %v408
        %v412 = vld [vmem:[%s331] sm:$0xff]
        %v413 = vld [vmem:[%s331 + $0x8] sm:$0xff]
        %v414 = vld [vmem:[%s331 + $0x10] sm:$0xff]
        %v415 = vld [vmem:[%s331 + $0x18] sm:$0xff]
        %v416 = vld [vmem:[%s331 + $0x20] sm:$0xff]
        %v417 = vld [vmem:[%s331 + $0x28] sm:$0xff]
        %v418 = vld [vmem:[%s331 + $0x30] sm:$0xff]
        %v419 = vld [vmem:[%s331 + $0x38] sm:$0xff]
        %v420 = vld [vmem:[%s331 + $0x40] sm:$0xff]
        %v421 = vld [vmem:[%s331 + $0x48] sm:$0xff]
        %v422 = vld [vmem:[%s331 + $0x50] sm:$0xff]
        %v423 = vld [vmem:[%s331 + $0x58] sm:$0xff]
        %v424 = vld [vmem:[%s331 + $0x60] sm:$0xff]
        %v425 = vld [vmem:[%s331 + $0x68] sm:$0xff]
        %v426 = vld [vmem:[%s331 + $0x70] sm:$0xff]
        %v427 = vld [vmem:[%s331 + $0x78] sm:$0xff]
        %v428 = vld [vmem:[%s331 + $0x80] sm:$0xff]
        %v429 = vld [vmem:[%s331 + $0x88] sm:$0xff]
        %v430 = vld [vmem:[%s331 + $0x90] sm:$0xff]
        %v431 = vld [vmem:[%s331 + $0x98] sm:$0xff]
        %v432 = vld [vmem:[%s331 + $0xa0] sm:$0xff]
        %v433 = vld [vmem:[%s331 + $0xa8] sm:$0xff]
        %v434 = vld [vmem:[%s331 + $0xb0] sm:$0xff]
        %v435 = vld [vmem:[%s331 + $0xb8] sm:$0xff]
        %v436 = vld [vmem:[%s331 + $0xc0] sm:$0xff]
        %v437 = vld [vmem:[%s331 + $0xc8] sm:$0xff]
        %v438 = vld [vmem:[%s331 + $0xd0] sm:$0xff]
        %v439 = vld [vmem:[%s331 + $0xd8] sm:$0xff]
        %v440 = vld [vmem:[%s331 + $0xe0] sm:$0xff]
        %v441 = vld [vmem:[%s331 + $0xe8] sm:$0xff]
        %v442 = vld [vmem:[%s331 + $0xf0] sm:$0xff]
        %v443 = vld [vmem:[%s331 + $0xf8] sm:$0xff]
        %v444 = vld [vmem:[%s331 + $0x100] sm:$0xff]
        %v445 = vld [vmem:[%s331 + $0x108] sm:$0xff]
        %v446 = vld [vmem:[%s331 + $0x110] sm:$0xff]
        %v447 = vld [vmem:[%s331 + $0x118] sm:$0xff]
        %v448 = vld [vmem:[%s331 + $0x120] sm:$0xff]
        %v449 = vld [vmem:[%s331 + $0x128] sm:$0xff]
        %v450 = vld [vmem:[%s331 + $0x130] sm:$0xff]
        %v451 = vld [vmem:[%s331 + $0x138] sm:$0xff]
        %v452 = vld [vmem:[%s331 + $0x140] sm:$0xff]
        %v453 = vld [vmem:[%s331 + $0x148] sm:$0xff]
        %v454 = vld [vmem:[%s331 + $0x150] sm:$0xff]
        %v455 = vld [vmem:[%s331 + $0x158] sm:$0xff]
        %v456 = vld [vmem:[%s331 + $0x160] sm:$0xff]
        %v457 = vld [vmem:[%s331 + $0x168] sm:$0xff]
        %v458 = vld [vmem:[%s331 + $0x170] sm:$0xff]
        %v459 = vld [vmem:[%s331 + $0x178] sm:$0xff]
        %v460 = vld [vmem:[%s331 + $0x180] sm:$0xff]
        %v461 = vld [vmem:[%s331 + $0x188] sm:$0xff]
        %v462 = vld [vmem:[%s331 + $0x190] sm:$0xff]
        %v463 = vld [vmem:[%s331 + $0x198] sm:$0xff]
        %v464 = vld [vmem:[%s331 + $0x1a0] sm:$0xff]
        %v465 = vld [vmem:[%s331 + $0x1a8] sm:$0xff]
        %v466 = vld [vmem:[%s331 + $0x1b0] sm:$0xff]
        %v467 = vld [vmem:[%s331 + $0x1b8] sm:$0xff]
        %v468 = vld [vmem:[%s331 + $0x1c0] sm:$0xff]
        %v469 = vld [vmem:[%s331 + $0x1c8] sm:$0xff]
        %v470 = vld [vmem:[%s331 + $0x1d0] sm:$0xff]
        %v471 = vld [vmem:[%s331 + $0x1d8] sm:$0xff]
        %v472 = vld [vmem:[%s331 + $0x1e0] sm:$0xff]
        %v473 = vld [vmem:[%s331 + $0x1e8] sm:$0xff]
        %v474 = vld [vmem:[%s331 + $0x1f0] sm:$0xff]
        %v475 = vld [vmem:[%s331 + $0x1f8] sm:$0xff]
        %v476 = vpack.c.bf16 %v416, %v412
        %v477 = vpack.c.bf16 %v417, %v413
        %v478 = vpack.c.bf16 %v418, %v414
        %v479 = vpack.c.bf16 %v419, %v415
        %v480 = vpack.c.bf16 %v424, %v420
        %v481 = vpack.c.bf16 %v425, %v421
        %v482 = vpack.c.bf16 %v426, %v422
        %v483 = vpack.c.bf16 %v427, %v423
        %v484 = vpack.c.bf16 %v432, %v428
        %v485 = vpack.c.bf16 %v433, %v429
        %v486 = vpack.c.bf16 %v434, %v430
        %v487 = vpack.c.bf16 %v435, %v431
        %v488 = vpack.c.bf16 %v440, %v436
        %v489 = vpack.c.bf16 %v441, %v437
        %v490 = vpack.c.bf16 %v442, %v438
        %v491 = vpack.c.bf16 %v443, %v439
        %v492 = vpack.c.bf16 %v448, %v444
        %v493 = vpack.c.bf16 %v449, %v445
        %v494 = vpack.c.bf16 %v450, %v446
        %v495 = vpack.c.bf16 %v451, %v447
        %v496 = vpack.c.bf16 %v456, %v452
        %v497 = vpack.c.bf16 %v457, %v453
        %v498 = vpack.c.bf16 %v458, %v454
        %v499 = vpack.c.bf16 %v459, %v455
        %v500 = vpack.c.bf16 %v464, %v460
        %v501 = vpack.c.bf16 %v465, %v461
        %v502 = vpack.c.bf16 %v466, %v462
        %v503 = vpack.c.bf16 %v467, %v463
        %v504 = vpack.c.bf16 %v472, %v468
        %v505 = vpack.c.bf16 %v473, %v469
        %v506 = vpack.c.bf16 %v474, %v470
        %v507 = vpack.c.bf16 %v475, %v471
        %508 = vmatprep.subr.bf16.mxu0 %v477
        %509 = vmatpush1.bf16.msra.mxu0 %v476
        %510 = vmatprep.subr.bf16.mxu0 %v481
        %511 = vmatpush1.bf16.msra.mxu0 %v480
        %512 = vmatprep.subr.bf16.mxu0 %v485
        %513 = vmatpush1.bf16.msra.mxu0 %v484
        %514 = vmatprep.subr.bf16.mxu0 %v489
        %515 = vmatpush1.bf16.msra.mxu0 %v488
        %516 = vmatprep.subr.bf16.mxu0 %v493
        %517 = vmatpush1.bf16.msra.mxu0 %v492
        %518 = vmatprep.subr.bf16.mxu0 %v497
        %519 = vmatpush1.bf16.msra.mxu0 %v496
        %520 = vmatprep.subr.bf16.mxu0 %v501
        %521 = vmatpush1.bf16.msra.mxu0 %v500
        %522 = vmatprep.subr.bf16.mxu0 %v505
        %523 = vmatpush1.bf16.msra.mxu0 %v504
        %524 = vmatprep.subr.bf16.mxu0 0
        %525 = vmatpush1.bf16.msra.mxu0 0
        %526 = vmatprep.subr.bf16.mxu0 0
        %527 = vmatpush1.bf16.msra.mxu0 0
        %528 = vmatprep.subr.bf16.mxu0 0
        %529 = vmatpush1.bf16.msra.mxu0 0
        %530 = vmatprep.subr.bf16.mxu0 0
        %531 = vmatpush1.bf16.msra.mxu0 0
        %532 = vmatprep.subr.bf16.mxu0 0
        %533 = vmatpush1.bf16.msra.mxu0 0
        %534 = vmatprep.subr.bf16.mxu0 0
        %535 = vmatpush1.bf16.msra.mxu0 0
        %536 = vmatprep.subr.bf16.mxu0 0
        %537 = vmatpush1.bf16.msra.mxu0 0
        %538 = vmatprep.subr.bf16.mxu0 0
        %539 = vmatpush1.bf16.msra.mxu0 0
        %540 = vmatprep.mubr.bf16.mxu0 0
        %541 = vmatmul.mubr.bf16.gmra.mrb[0].mxu0 %v410
        %v542 = vpop.f32.mrb[0].mxu0
        %v543 = vadd.f32 0.0, %v542
        %v544 = vpop.f32.mrb[0].mxu0
        %v545 = vadd.f32 0.0, %v544
        %v546 = vpop.f32.mrb[0].mxu0
        %v547 = vadd.f32 0.0, %v546
        %v548 = vpop.f32.mrb[0].mxu0
        %v549 = vadd.f32 0.0, %v548
        %550 = vmatprep.mubr.bf16.mxu0 0
        %551 = vmatmul.mubr.bf16.gmra.mrb[0].mxu0 %v411
        %v552 = vpop.f32.mrb[0].mxu0
        %v553 = vadd.f32 0.0, %v552
        %v554 = vpop.f32.mrb[0].mxu0
        %v555 = vadd.f32 0.0, %v554
        %v556 = vpop.f32.mrb[0].mxu0
        %v557 = vadd.f32 0.0, %v556
        %v558 = vpop.f32.mrb[0].mxu0
        %v559 = vadd.f32 0.0, %v558
        %560 = vdwg.mxu0
        %561 = vmatprep.subr.bf16.mxu0 %v479
        %562 = vmatpush1.bf16.msra.mxu0 %v478
        %563 = vmatprep.subr.bf16.mxu0 %v483
        %564 = vmatpush1.bf16.msra.mxu0 %v482
        %565 = vmatprep.subr.bf16.mxu0 %v487
        %566 = vmatpush1.bf16.msra.mxu0 %v486
        %567 = vmatprep.subr.bf16.mxu0 %v491
        %568 = vmatpush1.bf16.msra.mxu0 %v490
        %569 = vmatprep.subr.bf16.mxu0 %v495
        %570 = vmatpush1.bf16.msra.mxu0 %v494
        %571 = vmatprep.subr.bf16.mxu0 %v499
        %572 = vmatpush1.bf16.msra.mxu0 %v498
        %573 = vmatprep.subr.bf16.mxu0 %v503
        %574 = vmatpush1.bf16.msra.mxu0 %v502
        %575 = vmatprep.subr.bf16.mxu0 %v507
        %576 = vmatpush1.bf16.msra.mxu0 %v506
        %577 = vmatprep.subr.bf16.mxu0 0
        %578 = vmatpush1.bf16.msra.mxu0 0
        %579 = vmatprep.subr.bf16.mxu0 0
        %580 = vmatpush1.bf16.msra.mxu0 0
        %581 = vmatprep.subr.bf16.mxu0 0
        %582 = vmatpush1.bf16.msra.mxu0 0
        %583 = vmatprep.subr.bf16.mxu0 0
        %584 = vmatpush1.bf16.msra.mxu0 0
        %585 = vmatprep.subr.bf16.mxu0 0
        %586 = vmatpush1.bf16.msra.mxu0 0
        %587 = vmatprep.subr.bf16.mxu0 0
        %588 = vmatpush1.bf16.msra.mxu0 0
        %589 = vmatprep.subr.bf16.mxu0 0
        %590 = vmatpush1.bf16.msra.mxu0 0
        %591 = vmatprep.subr.bf16.mxu0 0
        %592 = vmatpush1.bf16.msra.mxu0 0
        %593 = vmatprep.mubr.bf16.mxu0 0
        %594 = vmatmul.mubr.bf16.gmra.mrb[0].mxu0 %v410
        %v595 = vpop.f32.mrb[0].mxu0
        %v596 = vadd.f32 0.0, %v595
        %v597 = vpop.f32.mrb[0].mxu0
        %v598 = vadd.f32 0.0, %v597
        %v599 = vpop.f32.mrb[0].mxu0
        %v600 = vadd.f32 0.0, %v599
        %v601 = vpop.f32.mrb[0].mxu0
        %v602 = vadd.f32 0.0, %v601
        %603 = vmatprep.mubr.bf16.mxu0 0
        %604 = vmatmul.mubr.bf16.gmra.mrb[0].mxu0 %v411
        %v605 = vpop.f32.mrb[0].mxu0
        %v606 = vadd.f32 0.0, %v605
        %v607 = vpop.f32.mrb[0].mxu0
        %v608 = vadd.f32 0.0, %v607
        %v609 = vpop.f32.mrb[0].mxu0
        %v610 = vadd.f32 0.0, %v609
        %v611 = vpop.f32.mrb[0].mxu0
        %v612 = vadd.f32 0.0, %v611
        %613 = vdwg.mxu0
        %v614 = vadd.f32 %v543, %v547
        %v615 = vadd.f32 %v614, %v553
        %v616 = vadd.f32 %v615, %v557
        %v617 = vrot.slane %v616, 4
        %v618 = vadd.f32 %v616, %v617
        %v619 = vrot.slane %v618, 2
        %v620 = vadd.f32 %v618, %v619
        %v621 = vrot.slane %v620, 1
        %v622 = vadd.f32 %v620, %v621
        %v623 = vadd.f32 %v545, %v549
        %v624 = vadd.f32 %v623, %v555
        %v625 = vadd.f32 %v624, %v559
        %v626 = vrot.slane %v625, 4
        %v627 = vadd.f32 %v625, %v626
        %v628 = vrot.slane %v627, 2
        %v629 = vadd.f32 %v627, %v628
        %v630 = vrot.slane %v629, 1
        %v631 = vadd.f32 %v629, %v630
        %v632 = vadd.f32 %v596, %v600
        %v633 = vadd.f32 %v632, %v606
        %v634 = vadd.f32 %v633, %v610
        %v635 = vrot.slane %v634, 4
        %v636 = vadd.f32 %v634, %v635
        %v637 = vrot.slane %v636, 2
        %v638 = vadd.f32 %v636, %v637
        %v639 = vrot.slane %v638, 1
        %v640 = vadd.f32 %v638, %v639
        %v641 = vadd.f32 %v598, %v602
        %v642 = vadd.f32 %v641, %v608
        %v643 = vadd.f32 %v642, %v612
        %v644 = vrot.slane %v643, 4
        %v645 = vadd.f32 %v643, %v644
        %v646 = vrot.slane %v645, 2
        %v647 = vadd.f32 %v645, %v646
        %v648 = vrot.slane %v647, 1
        %v649 = vadd.f32 %v647, %v648
        %v650 = vmul.f32 %v622, 0.03125
        %v651 = vmul.f32 %v631, 0.03125
        %v652 = vmul.f32 %v640, 0.03125
        %v653 = vmul.f32 %v649, 0.03125
        %v654 = vsub.f32 %v543, %v650
        %v655 = vsub.f32 %v545, %v651
        %v656 = vsub.f32 %v596, %v652
        %v657 = vsub.f32 %v598, %v653
        %v658 = vsub.f32 %v547, %v650
        %v659 = vsub.f32 %v549, %v651
        %v660 = vsub.f32 %v600, %v652
        %v661 = vsub.f32 %v602, %v653
        %v662 = vsub.f32 %v553, %v650
        %v663 = vsub.f32 %v555, %v651
        %v664 = vsub.f32 %v606, %v652
        %v665 = vsub.f32 %v608, %v653
        %v666 = vsub.f32 %v557, %v650
        %v667 = vsub.f32 %v559, %v651
        %v668 = vsub.f32 %v610, %v652
        %v669 = vsub.f32 %v612, %v653
        %v670 = vmul.f32 %v654, %v654
        %v671 = vmul.f32 %v655, %v655
        %v672 = vmul.f32 %v656, %v656
        %v673 = vmul.f32 %v657, %v657
        %v674 = vmul.f32 %v658, %v658
        %v675 = vmul.f32 %v659, %v659
        %v676 = vmul.f32 %v660, %v660
        %v677 = vmul.f32 %v661, %v661
        %v678 = vmul.f32 %v662, %v662
        %v679 = vmul.f32 %v663, %v663
        %v680 = vmul.f32 %v664, %v664
        %v681 = vmul.f32 %v665, %v665
        %v682 = vmul.f32 %v666, %v666
        %v683 = vmul.f32 %v667, %v667
        %v684 = vmul.f32 %v668, %v668
        %v685 = vmul.f32 %v669, %v669
        %v686 = vadd.f32 %v670, %v674
        %v687 = vadd.f32 %v686, %v678
        %v688 = vadd.f32 %v687, %v682
        %v689 = vrot.slane %v688, 4
        %v690 = vadd.f32 %v688, %v689
        %v691 = vrot.slane %v690, 2
        %v692 = vadd.f32 %v690, %v691
        %v693 = vrot.slane %v692, 1
        %v694 = vadd.f32 %v692, %v693
        %v695 = vadd.f32 %v671, %v675
        %v696 = vadd.f32 %v695, %v679
        %v697 = vadd.f32 %v696, %v683
        %v698 = vrot.slane %v697, 4
        %v699 = vadd.f32 %v697, %v698
        %v700 = vrot.slane %v699, 2
        %v701 = vadd.f32 %v699, %v700
        %v702 = vrot.slane %v701, 1
        %v703 = vadd.f32 %v701, %v702
        %v704 = vadd.f32 %v672, %v676
        %v705 = vadd.f32 %v704, %v680
        %v706 = vadd.f32 %v705, %v684
        %v707 = vrot.slane %v706, 4
        %v708 = vadd.f32 %v706, %v707
        %v709 = vrot.slane %v708, 2
        %v710 = vadd.f32 %v708, %v709
        %v711 = vrot.slane %v710, 1
        %v712 = vadd.f32 %v710, %v711
        %v713 = vadd.f32 %v673, %v677
        %v714 = vadd.f32 %v713, %v681
        %v715 = vadd.f32 %v714, %v685
        %v716 = vrot.slane %v715, 4
        %v717 = vadd.f32 %v715, %v716
        %v718 = vrot.slane %v717, 2
        %v719 = vadd.f32 %v717, %v718
        %v720 = vrot.slane %v719, 1
        %v721 = vadd.f32 %v719, %v720
        %v722 = vmul.f32 %v694, 0.03125
        %v723 = vmul.f32 %v703, 0.03125
        %v724 = vmul.f32 %v712, 0.03125
        %v725 = vmul.f32 %v721, 0.03125
        %v726 = vld [vmem:[%s340] sm:$0xf]
        %v727 = vadd.f32 %v722, 1e-05
        %v728 = vadd.f32 %v723, 1e-05
        %v729 = vadd.f32 %v724, 1e-05
        %v730 = vadd.f32 %v725, 1e-05
        %v731 = vrsqrt.pop %v727
        %v732 = vrsqrt.pop %v728
        %v733 = vrsqrt.pop %v729
        %v734 = vrsqrt.pop %v730
        %v739 = vcombine.low %v731, %v732
        %v740 = vcombine.low %v733, %v734
        %v742 = vunpack.c.l.s4 1966171168
        %v743 = vunpack.c.0.s8 %v742
        %v744 = vlaneseq
        %v745 = vshrl.u32 %v744, 7
        %v746 = vsub.s32 %v743, %v745
        %v747 = vrot.slane %v739, %v746
        %v749 = vunpack.c.l.s4 1966171168
        %v750 = vunpack.c.0.s8 %v749
        %v751 = vlaneseq
        %v752 = vshrl.u32 %v751, 7
        %v753 = vsub.s32 %v750, %v752
        %v754 = vrot.slane %v740, %v753
        %v755 = vcombine.low %v747, %v754
        %v757 = vunpack.c.l.s4 1966171168
        %v758 = vunpack.c.0.s8 %v757
        %v759 = vlaneseq
        %v760 = vshrl.u32 %v759, 7
        %v761 = vsub.s32 %v758, %v760
        %v762 = vrot.slane %v755, %v761
        %v764 = vmul.f32 %v726, %v762
        %v766 = vlaneseq
        %v767 = vshrl.u32 %v766, 7
        %v768 = vsub.s32 0, %v767
        %v769 = vrot.slane %v764, %v768
        %v770 = vlaneseq
        %v771 = vshrl.u32 %v770, 7
        %v772 = vsub.s32 1, %v771
        %v773 = vrot.slane %v764, %v772
        %v774 = vlaneseq
        %v775 = vshrl.u32 %v774, 7
        %v776 = vsub.s32 2, %v775
        %v777 = vrot.slane %v764, %v776
        %v778 = vlaneseq
        %v779 = vshrl.u32 %v778, 7
        %v780 = vsub.s32 3, %v779
        %v781 = vrot.slane %v764, %v780
        %v786 = vmul.f32 %v654, %v769
        %v787 = vmul.f32 %v655, %v773
        %v788 = vmul.f32 %v656, %v777
        %v789 = vmul.f32 %v657, %v781
        %v790 = vmul.f32 %v658, %v769
        %v791 = vmul.f32 %v659, %v773
        %v792 = vmul.f32 %v660, %v777
        %v793 = vmul.f32 %v661, %v781
        %v794 = vmul.f32 %v662, %v769
        %v795 = vmul.f32 %v663, %v773
        %v796 = vmul.f32 %v664, %v777
        %v797 = vmul.f32 %v665, %v781
        %v798 = vmul.f32 %v666, %v769
        %v799 = vmul.f32 %v667, %v773
        %v800 = vmul.f32 %v668, %v777
        %v801 = vmul.f32 %v669, %v781
        %v802 = vld [vmem:[%s394] sm:$0xf]
        %v804 = vlaneseq
        %v805 = vshrl.u32 %v804, 7
        %v806 = vsub.s32 0, %v805
        %v807 = vrot.slane %v802, %v806
        %v808 = vlaneseq
        %v809 = vshrl.u32 %v808, 7
        %v810 = vsub.s32 1, %v809
        %v811 = vrot.slane %v802, %v810
        %v812 = vlaneseq
        %v813 = vshrl.u32 %v812, 7
        %v814 = vsub.s32 2, %v813
        %v815 = vrot.slane %v802, %v814
        %v816 = vlaneseq
        %v817 = vshrl.u32 %v816, 7
        %v818 = vsub.s32 3, %v817
        %v819 = vrot.slane %v802, %v818
        %v824 = vadd.f32 %v786, %v807
        %v825 = vadd.f32 %v787, %v811
        %v826 = vadd.f32 %v788, %v815
        %v827 = vadd.f32 %v789, %v819
        %v828 = vadd.f32 %v790, %v807
        %v829 = vadd.f32 %v791, %v811
        %v830 = vadd.f32 %v792, %v815
        %v831 = vadd.f32 %v793, %v819
        %v832 = vadd.f32 %v794, %v807
        %v833 = vadd.f32 %v795, %v811
        %v834 = vadd.f32 %v796, %v815
        %v835 = vadd.f32 %v797, %v819
        %v836 = vadd.f32 %v798, %v807
        %v837 = vadd.f32 %v799, %v811
        %v838 = vadd.f32 %v800, %v815
        %v839 = vadd.f32 %v801, %v819
        %v840 = vmax.f32 %v824, 0.0
        %v841 = vmax.f32 %v825, 0.0
        %v842 = vmax.f32 %v826, 0.0
        %v843 = vmax.f32 %v827, 0.0
        %v844 = vmax.f32 %v828, 0.0
        %v845 = vmax.f32 %v829, 0.0
        %v846 = vmax.f32 %v830, 0.0
        %v847 = vmax.f32 %v831, 0.0
        %v848 = vmax.f32 %v832, 0.0
        %v849 = vmax.f32 %v833, 0.0
        %v850 = vmax.f32 %v834, 0.0
        %v851 = vmax.f32 %v835, 0.0
        %v852 = vmax.f32 %v836, 0.0
        %v853 = vmax.f32 %v837, 0.0
        %v854 = vmax.f32 %v838, 0.0
        %v855 = vmax.f32 %v839, 0.0
        %v856 = vld [vmem:[#allocation10] sm:$0xff]
        %v857 = vld [vmem:[#allocation10 + $0x8] sm:$0xff]
        %v858 = vld [vmem:[#allocation10 + $0x10] sm:$0xff]
        %v859 = vld [vmem:[#allocation10 + $0x18] sm:$0xff]
        %v860 = vpack.c.bf16 %v844, %v840
        %v861 = vpack.c.bf16 %v845, %v841
        %v862 = vpack.c.bf16 %v846, %v842
        %v863 = vpack.c.bf16 %v847, %v843
        %v864 = vpack.c.bf16 %v852, %v848
        %v865 = vpack.c.bf16 %v853, %v849
        %v866 = vpack.c.bf16 %v854, %v850
        %v867 = vpack.c.bf16 %v855, %v851
        %v868 = vld [vmem:[%s349] sm:$0xff]
        %v869 = vld [vmem:[%s349 + $0x8] sm:$0xff]
        %v870 = vld [vmem:[%s349 + $0x10] sm:$0xff]
        %v871 = vld [vmem:[%s349 + $0x18] sm:$0xff]
        %v872 = vld [vmem:[%s349 + $0x20] sm:$0xff]
        %v873 = vld [vmem:[%s349 + $0x28] sm:$0xff]
        %v874 = vld [vmem:[%s349 + $0x30] sm:$0xff]
        %v875 = vld [vmem:[%s349 + $0x38] sm:$0xff]
        %v876 = vld [vmem:[%s349 + $0x40] sm:$0xff]
        %v877 = vld [vmem:[%s349 + $0x48] sm:$0xff]
        %v878 = vld [vmem:[%s349 + $0x50] sm:$0xff]
        %v879 = vld [vmem:[%s349 + $0x58] sm:$0xff]
        %v880 = vld [vmem:[%s349 + $0x60] sm:$0xff]
        %v881 = vld [vmem:[%s349 + $0x68] sm:$0xff]
        %v882 = vld [vmem:[%s349 + $0x70] sm:$0xff]
        %v883 = vld [vmem:[%s349 + $0x78] sm:$0xff]
        %v884 = vld [vmem:[%s349 + $0x80] sm:$0xff]
        %v885 = vld [vmem:[%s349 + $0x88] sm:$0xff]
        %v886 = vld [vmem:[%s349 + $0x90] sm:$0xff]
        %v887 = vld [vmem:[%s349 + $0x98] sm:$0xff]
        %v888 = vld [vmem:[%s349 + $0xa0] sm:$0xff]
        %v889 = vld [vmem:[%s349 + $0xa8] sm:$0xff]
        %v890 = vld [vmem:[%s349 + $0xb0] sm:$0xff]
        %v891 = vld [vmem:[%s349 + $0xb8] sm:$0xff]
        %v892 = vld [vmem:[%s349 + $0xc0] sm:$0xff]
        %v893 = vld [vmem:[%s349 + $0xc8] sm:$0xff]
        %v894 = vld [vmem:[%s349 + $0xd0] sm:$0xff]
        %v895 = vld [vmem:[%s349 + $0xd8] sm:$0xff]
        %v896 = vld [vmem:[%s349 + $0xe0] sm:$0xff]
        %v897 = vld [vmem:[%s349 + $0xe8] sm:$0xff]
        %v898 = vld [vmem:[%s349 + $0xf0] sm:$0xff]
        %v899 = vld [vmem:[%s349 + $0xf8] sm:$0xff]
        %v900 = vld [vmem:[%s349 + $0x100] sm:$0xff]
        %v901 = vld [vmem:[%s349 + $0x108] sm:$0xff]
        %v902 = vld [vmem:[%s349 + $0x110] sm:$0xff]
        %v903 = vld [vmem:[%s349 + $0x118] sm:$0xff]
        %v904 = vld [vmem:[%s349 + $0x120] sm:$0xff]
        %v905 = vld [vmem:[%s349 + $0x128] sm:$0xff]
        %v906 = vld [vmem:[%s349 + $0x130] sm:$0xff]
        %v907 = vld [vmem:[%s349 + $0x138] sm:$0xff]
        %v908 = vld [vmem:[%s349 + $0x140] sm:$0xff]
        %v909 = vld [vmem:[%s349 + $0x148] sm:$0xff]
        %v910 = vld [vmem:[%s349 + $0x150] sm:$0xff]
        %v911 = vld [vmem:[%s349 + $0x158] sm:$0xff]
        %v912 = vld [vmem:[%s349 + $0x160] sm:$0xff]
        %v913 = vld [vmem:[%s349 + $0x168] sm:$0xff]
        %v914 = vld [vmem:[%s349 + $0x170] sm:$0xff]
        %v915 = vld [vmem:[%s349 + $0x178] sm:$0xff]
        %v916 = vld [vmem:[%s349 + $0x180] sm:$0xff]
        %v917 = vld [vmem:[%s349 + $0x188] sm:$0xff]
        %v918 = vld [vmem:[%s349 + $0x190] sm:$0xff]
        %v919 = vld [vmem:[%s349 + $0x198] sm:$0xff]
        %v920 = vld [vmem:[%s349 + $0x1a0] sm:$0xff]
        %v921 = vld [vmem:[%s349 + $0x1a8] sm:$0xff]
        %v922 = vld [vmem:[%s349 + $0x1b0] sm:$0xff]
        %v923 = vld [vmem:[%s349 + $0x1b8] sm:$0xff]
        %v924 = vld [vmem:[%s349 + $0x1c0] sm:$0xff]
        %v925 = vld [vmem:[%s349 + $0x1c8] sm:$0xff]
        %v926 = vld [vmem:[%s349 + $0x1d0] sm:$0xff]
        %v927 = vld [vmem:[%s349 + $0x1d8] sm:$0xff]
        %v928 = vld [vmem:[%s349 + $0x1e0] sm:$0xff]
        %v929 = vld [vmem:[%s349 + $0x1e8] sm:$0xff]
        %v930 = vld [vmem:[%s349 + $0x1f0] sm:$0xff]
        %v931 = vld [vmem:[%s349 + $0x1f8] sm:$0xff]
        %v932 = vpack.c.bf16 %v869, %v868
        %v933 = vpack.c.bf16 %v871, %v870
        %v934 = vpack.c.bf16 %v873, %v872
        %v935 = vpack.c.bf16 %v875, %v874
        %v936 = vpack.c.bf16 %v877, %v876
        %v937 = vpack.c.bf16 %v879, %v878
        %v938 = vpack.c.bf16 %v881, %v880
        %v939 = vpack.c.bf16 %v883, %v882
        %v940 = vpack.c.bf16 %v885, %v884
        %v941 = vpack.c.bf16 %v887, %v886
        %v942 = vpack.c.bf16 %v889, %v888
        %v943 = vpack.c.bf16 %v891, %v890
        %v944 = vpack.c.bf16 %v893, %v892
        %v945 = vpack.c.bf16 %v895, %v894
        %v946 = vpack.c.bf16 %v897, %v896
        %v947 = vpack.c.bf16 %v899, %v898
        %v948 = vpack.c.bf16 %v901, %v900
        %v949 = vpack.c.bf16 %v903, %v902
        %v950 = vpack.c.bf16 %v905, %v904
        %v951 = vpack.c.bf16 %v907, %v906
        %v952 = vpack.c.bf16 %v909, %v908
        %v953 = vpack.c.bf16 %v911, %v910
        %v954 = vpack.c.bf16 %v913, %v912
        %v955 = vpack.c.bf16 %v915, %v914
        %v956 = vpack.c.bf16 %v917, %v916
        %v957 = vpack.c.bf16 %v919, %v918
        %v958 = vpack.c.bf16 %v921, %v920
        %v959 = vpack.c.bf16 %v923, %v922
        %v960 = vpack.c.bf16 %v925, %v924
        %v961 = vpack.c.bf16 %v927, %v926
        %v962 = vpack.c.bf16 %v929, %v928
        %v963 = vpack.c.bf16 %v931, %v930
        %964 = vmatprep.subr.bf16.mxu0 0
        %965 = vmatpush1.bf16.msra.mxu0 %v932
        %966 = vmatprep.subr.bf16.mxu0 0
        %967 = vmatpush1.bf16.msra.mxu0 %v933
        %968 = vmatprep.subr.bf16.mxu0 0
        %969 = vmatpush1.bf16.msra.mxu0 %v934
        %970 = vmatprep.subr.bf16.mxu0 0
        %971 = vmatpush1.bf16.msra.mxu0 %v935
        %972 = vmatprep.subr.bf16.mxu0 0
        %973 = vmatpush1.bf16.msra.mxu0 %v936
        %974 = vmatprep.subr.bf16.mxu0 0
        %975 = vmatpush1.bf16.msra.mxu0 %v937
        %976 = vmatprep.subr.bf16.mxu0 0
        %977 = vmatpush1.bf16.msra.mxu0 %v938
        %978 = vmatprep.subr.bf16.mxu0 0
        %979 = vmatpush1.bf16.msra.mxu0 %v939
        %980 = vmatprep.subr.bf16.mxu0 0
        %981 = vmatpush1.bf16.msra.mxu0 %v940
        %982 = vmatprep.subr.bf16.mxu0 0
        %983 = vmatpush1.bf16.msra.mxu0 %v941
        %984 = vmatprep.subr.bf16.mxu0 0
        %985 = vmatpush1.bf16.msra.mxu0 %v942
        %986 = vmatprep.subr.bf16.mxu0 0
        %987 = vmatpush1.bf16.msra.mxu0 %v943
        %988 = vmatprep.subr.bf16.mxu0 0
        %989 = vmatpush1.bf16.msra.mxu0 %v944
        %990 = vmatprep.subr.bf16.mxu0 0
        %991 = vmatpush1.bf16.msra.mxu0 %v945
        %992 = vmatprep.subr.bf16.mxu0 0
        %993 = vmatpush1.bf16.msra.mxu0 %v946
        %994 = vmatprep.subr.bf16.mxu0 0
        %995 = vmatpush1.bf16.msra.mxu0 %v947
        %996 = vmatprep.mubr.bf16.mxu0 %v861
        %997 = vmatmul.mubr.bf16.gmra.mrb[0].mxu0 %v860
        %v998 = vpop.f32.mrb[0].mxu0
        %v999 = vadd.f32 0.0, %v998
        %v1000 = vpop.f32.mrb[0].mxu0
        %v1001 = vpop.f32.mrb[0].mxu0
        %v1002 = vadd.f32 0.0, %v1001
        %v1003 = vpop.f32.mrb[0].mxu0
        %1004 = vmatprep.mubr.bf16.mxu0 %v865
        %1005 = vmatmul.mubr.bf16.gmra.mrb[0].mxu0 %v864
        %v1006 = vpop.f32.mrb[0].mxu0
        %v1007 = vadd.f32 0.0, %v1006
        %v1008 = vpop.f32.mrb[0].mxu0
        %v1009 = vpop.f32.mrb[0].mxu0
        %v1010 = vadd.f32 0.0, %v1009
        %v1011 = vpop.f32.mrb[0].mxu0
        %1012 = vdwg.mxu0
        %1013 = vmatprep.subr.bf16.mxu0 0
        %1014 = vmatpush1.bf16.msra.mxu0 %v948
        %1015 = vmatprep.subr.bf16.mxu0 0
        %1016 = vmatpush1.bf16.msra.mxu0 %v949
        %1017 = vmatprep.subr.bf16.mxu0 0
        %1018 = vmatpush1.bf16.msra.mxu0 %v950
        %1019 = vmatprep.subr.bf16.mxu0 0
        %1020 = vmatpush1.bf16.msra.mxu0 %v951
        %1021 = vmatprep.subr.bf16.mxu0 0
        %1022 = vmatpush1.bf16.msra.mxu0 %v952
        %1023 = vmatprep.subr.bf16.mxu0 0
        %1024 = vmatpush1.bf16.msra.mxu0 %v953
        %1025 = vmatprep.subr.bf16.mxu0 0
        %1026 = vmatpush1.bf16.msra.mxu0 %v954
        %1027 = vmatprep.subr.bf16.mxu0 0
        %1028 = vmatpush1.bf16.msra.mxu0 %v955
        %1029 = vmatprep.subr.bf16.mxu0 0
        %1030 = vmatpush1.bf16.msra.mxu0 %v956
        %1031 = vmatprep.subr.bf16.mxu0 0
        %1032 = vmatpush1.bf16.msra.mxu0 %v957
        %1033 = vmatprep.subr.bf16.mxu0 0
        %1034 = vmatpush1.bf16.msra.mxu0 %v958
        %1035 = vmatprep.subr.bf16.mxu0 0
        %1036 = vmatpush1.bf16.msra.mxu0 %v959
        %1037 = vmatprep.subr.bf16.mxu0 0
        %1038 = vmatpush1.bf16.msra.mxu0 %v960
        %1039 = vmatprep.subr.bf16.mxu0 0
        %1040 = vmatpush1.bf16.msra.mxu0 %v961
        %1041 = vmatprep.subr.bf16.mxu0 0
        %1042 = vmatpush1.bf16.msra.mxu0 %v962
        %1043 = vmatprep.subr.bf16.mxu0 0
        %1044 = vmatpush1.bf16.msra.mxu0 %v963
        %1045 = vmatprep.mubr.bf16.mxu0 %v863
        %1046 = vmatmul.mubr.bf16.gmra.mrb[0].mxu0 %v862
        %v1047 = vpop.f32.mrb[0].mxu0
        %v1048 = vadd.f32 %v999, %v1047
        %v1049 = vpop.f32.mrb[0].mxu0
        %v1050 = vpop.f32.mrb[0].mxu0
        %v1051 = vadd.f32 %v1002, %v1050
        %v1052 = vpop.f32.mrb[0].mxu0
        %1053 = vmatprep.mubr.bf16.mxu0 %v867
        %1054 = vmatmul.mubr.bf16.gmra.mrb[0].mxu0 %v866
        %v1055 = vpop.f32.mrb[0].mxu0
        %v1056 = vadd.f32 %v1007, %v1055
        %v1057 = vpop.f32.mrb[0].mxu0
        %v1058 = vpop.f32.mrb[0].mxu0
        %v1059 = vadd.f32 %v1010, %v1058
        %v1060 = vpop.f32.mrb[0].mxu0
        %1061 = vdwg.mxu0
        %v1062 = vadd.f32 %v856, %v1048
        %v1063 = vadd.f32 %v857, %v1051
        %v1064 = vadd.f32 %v858, %v1056
        %v1065 = vadd.f32 %v859, %v1059
        %1066 = vst [vmem:[#allocation10] sm:$0xff] %v1062
        %1067 = vst [vmem:[#allocation10 + $0x8] sm:$0xff] %v1063
        %1068 = vst [vmem:[#allocation10 + $0x10] sm:$0xff] %v1064
        %1069 = vst [vmem:[#allocation10 + $0x18] sm:$0xff] %v1065
        %p1070 = scmp.eq.s32.totalorder %s26, 1
        // Predicated region
        $region69: #{tpu_custom_call.1} parent=47 // pred_check
          %p1071 = pneg %p1070
        $region70: #{tpu_custom_call.1} parent=47 // pred_check_branch
          %1073 = sbr.rel (%p1071) target = $region72
        $region71: #{tpu_custom_call.1} parent=47 // pred_region
          %v1074 = vld [vmem:[#allocation10] sm:$0xff]
          %v1075 = vld [vmem:[#allocation10 + $0x8] sm:$0xff]
          %v1076 = vld [vmem:[#allocation10 + $0x10] sm:$0xff]
          %v1077 = vld [vmem:[#allocation10 + $0x18] sm:$0xff]
          %v1078 = vadd.f32 %v1074, %v1075
          %v1079 = vadd.f32 %v1078, %v1076
          %v1080 = vadd.f32 %v1079, %v1077
          %v1081 = vrot.slane %v1080, 4
          %v1082 = vadd.f32 %v1080, %v1081
          %v1083 = vrot.slane %v1082, 2
          %v1084 = vadd.f32 %v1082, %v1083
          %v1085 = vrot.slane %v1084, 1
          %v1086 = vadd.f32 %v1084, %v1085
          %v1087 = vmul.f32 %v1086, 0.03125
          %v1088 = vsub.f32 %v1074, %v1087
          %v1089 = vsub.f32 %v1075, %v1087
          %v1090 = vsub.f32 %v1076, %v1087
          %v1091 = vsub.f32 %v1077, %v1087
          %v1092 = vmul.f32 %v1088, %v1088
          %v1093 = vmul.f32 %v1089, %v1089
          %v1094 = vmul.f32 %v1090, %v1090
          %v1095 = vmul.f32 %v1091, %v1091
          %v1096 = vadd.f32 %v1092, %v1093
          %v1097 = vadd.f32 %v1096, %v1094
          %v1098 = vadd.f32 %v1097, %v1095
          %v1099 = vrot.slane %v1098, 4
          %v1100 = vadd.f32 %v1098, %v1099
          %v1101 = vrot.slane %v1100, 2
          %v1102 = vadd.f32 %v1100, %v1101
          %v1103 = vrot.slane %v1102, 1
          %v1104 = vadd.f32 %v1102, %v1103
          %v1105 = vmul.f32 %v1104, 0.03125
          %v1106 = vld [vmem:[%s5] sm:$0x1]
          %v1107 = vadd.f32 %v1105, 1e-05
          %v1108 = vrsqrt.pop %v1107
          %v1109 = vmul.f32 %v1106, %v1108
          %v1111 = vlaneseq
          %v1112 = vshrl.u32 %v1111, 7
          %v1113 = vsub.s32 0, %v1112
          %v1114 = vrot.slane %v1109, %v1113
          %v1116 = vmul.f32 %v1088, %v1114
          %v1117 = vmul.f32 %v1089, %v1114
          %v1118 = vmul.f32 %v1090, %v1114
          %v1119 = vmul.f32 %v1091, %v1114
          %v1120 = vld [vmem:[%s6] sm:$0x1]
          %v1122 = vlaneseq
          %v1123 = vshrl.u32 %v1122, 7
          %v1124 = vsub.s32 0, %v1123
          %v1125 = vrot.slane %v1120, %v1124
          %v1127 = vadd.f32 %v1116, %v1125
          %v1128 = vadd.f32 %v1117, %v1125
          %v1129 = vadd.f32 %v1118, %v1125
          %v1130 = vadd.f32 %v1119, %v1125
          %1131 = vst [vmem:[#allocation10] sm:$0xff] %v1127
          %1132 = vst [vmem:[#allocation10 + $0x8] sm:$0xff] %v1128
          %1133 = vst [vmem:[#allocation10 + $0x10] sm:$0xff] %v1129
          %1134 = vst [vmem:[#allocation10 + $0x18] sm:$0xff] %v1130
        $region72: #{tpu_custom_call.1} parent=47 // pred_fallthru
          _
        // Predicated region
        $region73: #{tpu_custom_call.1} parent=47 // pred_check
          %p1135 = pneg %p206
        $region74: #{tpu_custom_call.1} parent=47 // pred_check_branch
          %1137 = sbr.rel (%p1135) target = $region76
        $region75: #{tpu_custom_call.1} parent=47 // pred_region
          %s1139 = ssub.s32 512, 512
          %1140 = vsyncadd [#allocation4], %s1139
          %s1141 = sshll.u32 [#allocation10], 4
          %s1142 = int_to_ptr.vmem [resolvable:$true] %s1141
          %1147 = dma.vmem_to_hbm [thread:$0]  %s1142, 512, %s7, [#allocation4], 128, 128, 8
        $region76: #{tpu_custom_call.1} parent=47 // pred_fallthru
          _
        // Predicated region
        $region77: #{tpu_custom_call.1} parent=47 // pred_check
          %p1148 = pneg %p206
        $region78: #{tpu_custom_call.1} parent=47 // pred_check_branch
          %1150 = sbr.rel (%p1148) target = $region80
        $region79: #{tpu_custom_call.1} parent=47 // pred_region
          %1151 = dma.done [#allocation4], 512
        $region80: #{tpu_custom_call.1} parent=47 // pred_fallthru
          _
      $region48: #{tpu_custom_call.1} parent=5 // pred_fallthru
        _
      %p1152 = scmp.le.s32.totalorder 2, %s21
      // Predicated region
      $region81: #{tpu_custom_call.1} parent=5 // pred_check
        %p1153 = pneg %p1152
      $region82: #{tpu_custom_call.1} parent=5 // pred_check_branch
        %1155 = sbr.rel (%p1153) target = $region84
      $region83: #{tpu_custom_call.1} parent=5 // pred_region
        %s1156 = ssub.s32 %s21, 2
      $region84: #{tpu_custom_call.1} parent=5 // pred_fallthru
        _
    $region6: #{tpu_custom_call.1} parent=1 // loop_footer
      %s25 = sadd.s32 1, %s21
    $region7: #{tpu_custom_call.1} parent=1 // loop_footer_branch
      %20 = sbr.rel target = $region3
    $region8: #{tpu_custom_call.1} parent=1 // loop_exit
      _
    %1157 = vsyncpa [#allocation3], 1
    %s1158 = scalar_lea.sflag [#allocation3], 1
    %1159 = vsyncpa %s1158, 1
    %1160 = vsyncpa [#allocation6], 1
    %s1161 = scalar_lea.sflag [#allocation6], 1
    %1162 = vsyncpa %s1161, 1
    %1163 = vsyncpa [#allocation9], 1
    %s1164 = scalar_lea.sflag [#allocation9], 1
    %1165 = vsyncpa %s1164, 1
    %1166 = vsyncpa [#allocation4], 1
    %s1167 = scalar_lea.sflag [#allocation4], 1
    %1168 = vsyncpa %s1167, 1

</llo_original>
